<compile_context>
chip_gen: v7x
topology: tpu7x:2x2x1
jax: 0.10.0
libtpu: 0.0.40
codegen_flags: <defaults>
</compile_context>

<pallas_src>
import math
import jax
import jax.numpy as jnp
from jax import lax
from jax.experimental import pallas as pl
from jax.experimental.pallas import tpu as pltpu

K = 15
EPSILON = 0.9
E_MIN = 0.9 ** 10


def navq_kernel(x_ref, cvs_ref, lbl_ref, edges_ref, conn_ref,
                loss_ref, edges_out_ref):
    x = x_ref[...]            # (B, D)
    cvs = cvs_ref[...]        # (C, D)
    lbl = lbl_ref[...]        # (B, 1) int32 labels
    edges0 = edges_ref[...]   # (C, C)
    conn = conn_ref[...]      # (C, C)

    B, D = x.shape
    C = cvs.shape[0]

    # ---- in-kernel one-hot labels (no one_hot op / (B,C) DMA in wrapper) ----
    col_i = lax.broadcasted_iota(jnp.int32, (B, C), 1)
    col_f = col_i.astype(jnp.float32)
    oh = (col_i == lbl).astype(jnp.float32)                           # (B, C)

    # ---- squared pairwise distances (torch.cdist ** 2) via MXU matmuls ----
    x2 = jnp.sum(x * x, axis=1, keepdims=True)                        # (B, 1)
    ones_1d = jnp.ones((1, D), jnp.float32)
    c2 = lax.dot_general(ones_1d, cvs * cvs,
                         (((1,), (1,)), ((), ())),
                         preferred_element_type=jnp.float32)          # (1, C)
    xc = lax.dot_general(x, cvs,
                         (((1,), (1,)), ((), ())),
                         preferred_element_type=jnp.float32)          # (B, C)
    dist2 = jnp.maximum(x2 + c2 - 2.0 * xc, 0.0)                      # (B, C)

    # ---- k-nearest selection (replaces torch.sort on dim=1) ----
    # Step 0 keeps the index tie-break so `closest_oh` is strictly one-hot;
    # the remaining K-1 steps use a single lane-min per step (distinct
    # distances assumed), halving the serial XLU reduction chain.
    work = dist2
    m0 = jnp.min(work, axis=1, keepdims=True)
    cand = jnp.where(work == m0, col_f, jnp.float32(C))
    idx0 = jnp.min(cand, axis=1, keepdims=True)
    closest_oh = (col_f == idx0).astype(jnp.float32)                  # (B, C)
    topk_mask = closest_oh
    work = jnp.where(closest_oh > 0, jnp.float32(jnp.inf), work)
    for _ in range(1, K):
        m = jnp.min(work, axis=1, keepdims=True)
        oh_k = (work == m).astype(jnp.float32)
        topk_mask = topk_mask + oh_k
        work = jnp.where(oh_k > 0, jnp.float32(jnp.inf), work)

    # ---- visit counts / encounter matrices ----
    cce = lax.dot_general(closest_oh, topk_mask,
                          (((0,), (0,)), ((), ())),
                          preferred_element_type=jnp.float32)         # (C, C)
    # vne[i] == cce[i, i] (closest cv is always in its own top-k), so take
    # the diagonal instead of an extra N=1 MXU pass.
    row_i = lax.broadcasted_iota(jnp.int32, (C, C), 0)
    colC_i = lax.broadcasted_iota(jnp.int32, (C, C), 1)
    eyeC = (row_i == colC_i).astype(jnp.float32)
    vne_col = jnp.sum(cce * eyeC, axis=1, keepdims=True)              # (C, 1)

    existence = (cce > 0).astype(jnp.float32)
    enc = jnp.maximum(vne_col - cce, 0.0)                # relu(encounters - cce)
    edges1 = jnp.maximum(edges0, existence)
    edges1 = edges1 * jnp.exp(enc * jnp.float32(math.log(EPSILON)))   # eps ** enc
    edges1 = edges1 * (edges1 >= jnp.float32(E_MIN)).astype(jnp.float32)

    # ---- per-sample row gathers (torch.index_select) as one-hot matmuls ----
    edges_sel = jnp.dot(oh, edges1, preferred_element_type=jnp.float32)  # (B, C)
    conn_sel = jnp.dot(oh, conn, preferred_element_type=jnp.float32)     # (B, C)
    neigh = jnp.logical_and(edges_sel > 0, conn_sel < 1).astype(jnp.float32)

    d_pos = jnp.sum(oh * dist2, axis=1, keepdims=True)   # ||x_i - cvs[label_i]||^2
    d_neg = dist2 * neigh
    expd = jnp.exp(-0.001 * d_neg) * (d_neg > 0).astype(jnp.float32)
    ssum = jnp.sum(expd, axis=1, keepdims=True)
    inv = pl.reciprocal(jnp.where(ssum > 0, ssum, 1.0), approx=True)  # EUP slot
    w = expd * inv                                        # NaN-free normalization
    mu = d_pos - jnp.sum(w * d_neg, axis=1, keepdims=True)
    loss = jnp.sum(jnp.maximum(mu, 0.0)) * jnp.float32(1.0 / B)

    loss_ref[0, 0] = loss                                 # scalar -> SMEM
    # state update self.edges = (edges + edges.T)/2, returned as second output
    edges_out_ref[...] = (edges1 + edges1.T) * 0.5


@jax.jit
def navq_forward(x, cvs, labels, edges, conn):
    B, D = x.shape
    C = cvs.shape[0]
    lbl = labels.astype(jnp.int32).reshape(B, 1)
    # Gridless call: everything fits in VMEM, so skip the software pipeline.
    # TODO(synk): for real batch / class sizes, tile B over a "parallel" grid
    # axis (v7x has 2 TensorCores) and tile the (C,C) matrices with a raised
    # vmem_limit_bytes; at B=8, C=128 that is pure overhead.
    loss, new_edges = pl.pallas_call(
        navq_kernel,
        out_shape=(jax.ShapeDtypeStruct((1, 1), jnp.float32),
                   jax.ShapeDtypeStruct((C, C), jnp.float32)),
        in_specs=[
            pl.BlockSpec(memory_space=pltpu.MemorySpace.VMEM),  # x
            pl.BlockSpec(memory_space=pltpu.MemorySpace.VMEM),  # cvs
            pl.BlockSpec(memory_space=pltpu.MemorySpace.VMEM),  # labels (B,1) i32
            pl.BlockSpec(memory_space=pltpu.MemorySpace.VMEM),  # edges
            pl.BlockSpec(memory_space=pltpu.MemorySpace.VMEM),  # cv_connectedness
        ],
        out_specs=(
            pl.BlockSpec(memory_space=pltpu.MemorySpace.SMEM),  # scalar loss
            pl.BlockSpec(memory_space=pltpu.MemorySpace.VMEM),  # new edges
        ),
    )(x, cvs, lbl, edges, conn)
    return loss[0, 0], new_edges


def navq_reference(x, cvs, labels, edges, conn, k=K):
    """Pure-JAX mirror of the PyTorch forward (for validation only)."""
    B = x.shape[0]
    C = cvs.shape[0]
    d2 = jnp.maximum(
        jnp.sum(x * x, 1, keepdims=True)
        + jnp.sum(cvs * cvs, 1)[None, :]
        - 2.0 * x @ cvs.T, 0.0)
    order = jnp.argsort(d2, axis=1)
    kth = order[:, :k]
    closest = kth[:, 0]
    vne = jnp.zeros(C, jnp.float32).at[closest].add(1.0)
    cce = jnp.zeros((C, C), jnp.float32).at[
        jnp.repeat(closest, k), kth.reshape(-1)].add(1.0)
    existence = (cce > 0).astype(jnp.float32)
    enc = jnp.maximum(vne[:, None] - cce, 0.0)
    e = jnp.maximum(edges, existence) * (EPSILON ** enc)
    e = e * (e >= E_MIN).astype(jnp.float32)
    d_pos = d2[jnp.arange(B), labels]
    mask = jnp.logical_and(e[labels] > 0, conn[labels] < 1).astype(jnp.float32)
    d_neg = d2 * mask
    expd = jnp.exp(-0.001 * d_neg) * (d_neg > 0).astype(jnp.float32)
    s = expd.sum(1, keepdims=True)
    w = expd / jnp.where(s > 0, s, 1.0)
    mu = d_pos - (w * d_neg).sum(1)
    loss = jnp.maximum(mu, 0.0).sum() / B
    return loss, (e + e.T) / 2


if __name__ == "__main__":
    B, D, C = 8, 32, 128   # batch, feat_dim, num_classes (TPU-friendly small sizes)
    key = jax.random.PRNGKey(0)
    kx, kc, kl = jax.random.split(key, 3)
    x = jax.random.normal(kx, (B, D), jnp.float32)
    cvs = jax.random.normal(kc, (C, D), jnp.float32)        # nn.Parameter(randn(C, D))
    labels = jax.random.randint(kl, (B,), 0, C)
    edges = jnp.eye(C, dtype=jnp.float32)                   # zeros + fill_diagonal_(1)
    conn = jnp.eye(C, dtype=jnp.float32)                    # cv_connectedness

    loss, new_edges = navq_forward(x, cvs, labels, edges, conn)
    jax.block_until_ready((loss, new_edges))

    ref_loss, ref_edges = navq_reference(x, cvs, labels, edges, conn)
    assert jnp.isfinite(loss), "loss is not finite"
    assert jnp.allclose(loss, ref_loss, rtol=1e-3, atol=1e-2), (loss, ref_loss)
    assert jnp.allclose(new_edges, ref_edges, rtol=1e-4, atol=1e-4)

    print("KERNEL_OK")
</pallas_src>

<mosaic_0001>
module attributes {stable_mosaic.version = 11 : i64} {
  func.func @navq_kernel(%arg0: memref<8x32xf32, #tpu.memory_space<vmem>>, %arg1: memref<128x32xf32, #tpu.memory_space<vmem>>, %arg2: memref<8x1xi32, #tpu.memory_space<vmem>>, %arg3: memref<128x128xf32, #tpu.memory_space<vmem>>, %arg4: memref<128x128xf32, #tpu.memory_space<vmem>>, %arg5: memref<1x1xf32, #tpu.memory_space<smem>>, %arg6: memref<128x128xf32, #tpu.memory_space<vmem>>) attributes {dimension_semantics = [], scalar_prefetch = 0 : i64, scratch_operands = 0 : i64, tpu.core_type = #tpu.core_type<tc>} {
    %c0 = arith.constant 0 : index
    %c0_0 = arith.constant 0 : index
    %0 = vector.load %arg0[%c0, %c0_0] : memref<8x32xf32, #tpu.memory_space<vmem>>, vector<8x32xf32>
    %c0_1 = arith.constant 0 : index
    %c0_2 = arith.constant 0 : index
    %1 = vector.load %arg1[%c0_1, %c0_2] : memref<128x32xf32, #tpu.memory_space<vmem>>, vector<128x32xf32>
    %c0_3 = arith.constant 0 : index
    %c0_4 = arith.constant 0 : index
    %2 = vector.load %arg2[%c0_3, %c0_4] : memref<8x1xi32, #tpu.memory_space<vmem>>, vector<8x1xi32>
    %c0_5 = arith.constant 0 : index
    %c0_6 = arith.constant 0 : index
    %3 = vector.load %arg3[%c0_5, %c0_6] : memref<128x128xf32, #tpu.memory_space<vmem>>, vector<128x128xf32>
    %c0_7 = arith.constant 0 : index
    %c0_8 = arith.constant 0 : index
    %4 = vector.load %arg4[%c0_7, %c0_8] : memref<128x128xf32, #tpu.memory_space<vmem>>, vector<128x128xf32>
    %5 = tpu.iota {dimensions = array<i32: 1>} : vector<8x128xi32>
    %6 = arith.sitofp %5 : vector<8x128xi32> to vector<8x128xf32>
    %7 = vector.broadcast %2 : vector<8x1xi32> to vector<8x128xi32>
    %8 = arith.cmpi eq, %5, %7 : vector<8x128xi32>
    %9 = arith.extui %8 : vector<8x128xi1> to vector<8x128xi32>
    %10 = arith.sitofp %9 : vector<8x128xi32> to vector<8x128xf32>
    %11 = arith.mulf %0, %0 : vector<8x32xf32>
    %cst = arith.constant dense<0.000000e+00> : vector<8xf32>
    %12 = vector.multi_reduction <add>, %11, %cst [1] : vector<8x32xf32> to vector<8xf32>
    %13 = vector.shape_cast %12 : vector<8xf32> to vector<8x1xf32>
    %cst_9 = arith.constant 1.000000e+00 : f32
    %14 = vector.broadcast %cst_9 : f32 to vector<1x32xf32>
    %15 = arith.mulf %1, %1 : vector<128x32xf32>
    %cst_10 = arith.constant dense<0.000000e+00> : vector<1x128xf32>
    %16 = tpu.matmul %14, %15, %cst_10 {dimension_numbers = #tpu.dot_dimension_numbers<[1], [1], [0], [0], [0, 0, 1, 0], [], []>} : vector<1x32xf32>, vector<128x32xf32>, vector<1x128xf32> -> vector<1x128xf32>
    %cst_11 = arith.constant dense<0.000000e+00> : vector<8x128xf32>
    %17 = tpu.matmul %0, %1, %cst_11 {dimension_numbers = #tpu.dot_dimension_numbers<[1], [1], [0], [0], [0, 0, 1, 0], [], []>} : vector<8x32xf32>, vector<128x32xf32>, vector<8x128xf32> -> vector<8x128xf32>
    %18 = vector.broadcast %13 : vector<8x1xf32> to vector<8x128xf32>
    %19 = vector.broadcast %16 : vector<1x128xf32> to vector<8x128xf32>
    %20 = arith.addf %18, %19 : vector<8x128xf32>
    %cst_12 = arith.constant 2.000000e+00 : f32
    %21 = vector.broadcast %cst_12 : f32 to vector<8x128xf32>
    %22 = arith.mulf %21, %17 : vector<8x128xf32>
    %23 = arith.subf %20, %22 : vector<8x128xf32>
    %cst_13 = arith.constant 0.000000e+00 : f32
    %24 = vector.broadcast %cst_13 : f32 to vector<8x128xf32>
    %25 = arith.maximumf %23, %24 : vector<8x128xf32>
    %cst_14 = arith.constant dense<0x7F800000> : vector<8xf32>
    %26 = vector.multi_reduction <minimumf>, %25, %cst_14 [1] : vector<8x128xf32> to vector<8xf32>
    %27 = vector.shape_cast %26 : vector<8xf32> to vector<8x1xf32>
    %28 = vector.broadcast %27 : vector<8x1xf32> to vector<8x128xf32>
    %29 = arith.cmpf oeq, %25, %28 : vector<8x128xf32>
    %cst_15 = arith.constant 1.280000e+02 : f32
    %30 = vector.broadcast %cst_15 : f32 to vector<8x128xf32>
    %31 = arith.select %29, %6, %30 : vector<8x128xi1>, vector<8x128xf32>
    %cst_16 = arith.constant dense<0x7F800000> : vector<8xf32>
    %32 = vector.multi_reduction <minimumf>, %31, %cst_16 [1] : vector<8x128xf32> to vector<8xf32>
    %33 = vector.shape_cast %32 : vector<8xf32> to vector<8x1xf32>
    %34 = vector.broadcast %33 : vector<8x1xf32> to vector<8x128xf32>
    %35 = arith.cmpf oeq, %6, %34 : vector<8x128xf32>
    %36 = arith.extui %35 : vector<8x128xi1> to vector<8x128xi32>
    %37 = arith.sitofp %36 : vector<8x128xi32> to vector<8x128xf32>
    %cst_17 = arith.constant 0.000000e+00 : f32
    %38 = vector.broadcast %cst_17 : f32 to vector<8x128xf32>
    %39 = arith.cmpf ogt, %37, %38 : vector<8x128xf32>
    %cst_18 = arith.constant 0x7F800000 : f32
    %40 = vector.broadcast %cst_18 : f32 to vector<8x128xf32>
    %41 = arith.select %39, %40, %25 : vector<8x128xi1>, vector<8x128xf32>
    %cst_19 = arith.constant dense<0x7F800000> : vector<8xf32>
    %42 = vector.multi_reduction <minimumf>, %41, %cst_19 [1] : vector<8x128xf32> to vector<8xf32>
    %43 = vector.shape_cast %42 : vector<8xf32> to vector<8x1xf32>
    %44 = vector.broadcast %43 : vector<8x1xf32> to vector<8x128xf32>
    %45 = arith.cmpf oeq, %41, %44 : vector<8x128xf32>
    %46 = arith.extui %45 : vector<8x128xi1> to vector<8x128xi32>
    %47 = arith.sitofp %46 : vector<8x128xi32> to vector<8x128xf32>
    %48 = arith.addf %37, %47 : vector<8x128xf32>
    %cst_20 = arith.constant 0.000000e+00 : f32
    %49 = vector.broadcast %cst_20 : f32 to vector<8x128xf32>
    %50 = arith.cmpf ogt, %47, %49 : vector<8x128xf32>
    %cst_21 = arith.constant 0x7F800000 : f32
    %51 = vector.broadcast %cst_21 : f32 to vector<8x128xf32>
    %52 = arith.select %50, %51, %41 : vector<8x128xi1>, vector<8x128xf32>
    %cst_22 = arith.constant dense<0x7F800000> : vector<8xf32>
    %53 = vector.multi_reduction <minimumf>, %52, %cst_22 [1] : vector<8x128xf32> to vector<8xf32>
    %54 = vector.shape_cast %53 : vector<8xf32> to vector<8x1xf32>
    %55 = vector.broadcast %54 : vector<8x1xf32> to vector<8x128xf32>
    %56 = arith.cmpf oeq, %52, %55 : vector<8x128xf32>
    %57 = arith.extui %56 : vector<8x128xi1> to vector<8x128xi32>
    %58 = arith.sitofp %57 : vector<8x128xi32> to vector<8x128xf32>
    %59 = arith.addf %48, %58 : vector<8x128xf32>
    %cst_23 = arith.constant 0.000000e+00 : f32
    %60 = vector.broadcast %cst_23 : f32 to vector<8x128xf32>
    %61 = arith.cmpf ogt, %58, %60 : vector<8x128xf32>
    %cst_24 = arith.constant 0x7F800000 : f32
    %62 = vector.broadcast %cst_24 : f32 to vector<8x128xf32>
    %63 = arith.select %61, %62, %52 : vector<8x128xi1>, vector<8x128xf32>
    %cst_25 = arith.constant dense<0x7F800000> : vector<8xf32>
    %64 = vector.multi_reduction <minimumf>, %63, %cst_25 [1] : vector<8x128xf32> to vector<8xf32>
    %65 = vector.shape_cast %64 : vector<8xf32> to vector<8x1xf32>
    %66 = vector.broadcast %65 : vector<8x1xf32> to vector<8x128xf32>
    %67 = arith.cmpf oeq, %63, %66 : vector<8x128xf32>
    %68 = arith.extui %67 : vector<8x128xi1> to vector<8x128xi32>
    %69 = arith.sitofp %68 : vector<8x128xi32> to vector<8x128xf32>
    %70 = arith.addf %59, %69 : vector<8x128xf32>
    %cst_26 = arith.constant 0.000000e+00 : f32
    %71 = vector.broadcast %cst_26 : f32 to vector<8x128xf32>
    %72 = arith.cmpf ogt, %69, %71 : vector<8x128xf32>
    %cst_27 = arith.constant 0x7F800000 : f32
    %73 = vector.broadcast %cst_27 : f32 to vector<8x128xf32>
    %74 = arith.select %72, %73, %63 : vector<8x128xi1>, vector<8x128xf32>
    %cst_28 = arith.constant dense<0x7F800000> : vector<8xf32>
    %75 = vector.multi_reduction <minimumf>, %74, %cst_28 [1] : vector<8x128xf32> to vector<8xf32>
    %76 = vector.shape_cast %75 : vector<8xf32> to vector<8x1xf32>
    %77 = vector.broadcast %76 : vector<8x1xf32> to vector<8x128xf32>
    %78 = arith.cmpf oeq, %74, %77 : vector<8x128xf32>
    %79 = arith.extui %78 : vector<8x128xi1> to vector<8x128xi32>
    %80 = arith.sitofp %79 : vector<8x128xi32> to vector<8x128xf32>
    %81 = arith.addf %70, %80 : vector<8x128xf32>
    %cst_29 = arith.constant 0.000000e+00 : f32
    %82 = vector.broadcast %cst_29 : f32 to vector<8x128xf32>
    %83 = arith.cmpf ogt, %80, %82 : vector<8x128xf32>
    %cst_30 = arith.constant 0x7F800000 : f32
    %84 = vector.broadcast %cst_30 : f32 to vector<8x128xf32>
    %85 = arith.select %83, %84, %74 : vector<8x128xi1>, vector<8x128xf32>
    %cst_31 = arith.constant dense<0x7F800000> : vector<8xf32>
    %86 = vector.multi_reduction <minimumf>, %85, %cst_31 [1] : vector<8x128xf32> to vector<8xf32>
    %87 = vector.shape_cast %86 : vector<8xf32> to vector<8x1xf32>
    %88 = vector.broadcast %87 : vector<8x1xf32> to vector<8x128xf32>
    %89 = arith.cmpf oeq, %85, %88 : vector<8x128xf32>
    %90 = arith.extui %89 : vector<8x128xi1> to vector<8x128xi32>
    %91 = arith.sitofp %90 : vector<8x128xi32> to vector<8x128xf32>
    %92 = arith.addf %81, %91 : vector<8x128xf32>
    %cst_32 = arith.constant 0.000000e+00 : f32
    %93 = vector.broadcast %cst_32 : f32 to vector<8x128xf32>
    %94 = arith.cmpf ogt, %91, %93 : vector<8x128xf32>
    %cst_33 = arith.constant 0x7F800000 : f32
    %95 = vector.broadcast %cst_33 : f32 to vector<8x128xf32>
    %96 = arith.select %94, %95, %85 : vector<8x128xi1>, vector<8x128xf32>
    %cst_34 = arith.constant dense<0x7F800000> : vector<8xf32>
    %97 = vector.multi_reduction <minimumf>, %96, %cst_34 [1] : vector<8x128xf32> to vector<8xf32>
    %98 = vector.shape_cast %97 : vector<8xf32> to vector<8x1xf32>
    %99 = vector.broadcast %98 : vector<8x1xf32> to vector<8x128xf32>
    %100 = arith.cmpf oeq, %96, %99 : vector<8x128xf32>
    %101 = arith.extui %100 : vector<8x128xi1> to vector<8x128xi32>
    %102 = arith.sitofp %101 : vector<8x128xi32> to vector<8x128xf32>
    %103 = arith.addf %92, %102 : vector<8x128xf32>
    %cst_35 = arith.constant 0.000000e+00 : f32
    %104 = vector.broadcast %cst_35 : f32 to vector<8x128xf32>
    %105 = arith.cmpf ogt, %102, %104 : vector<8x128xf32>
    %cst_36 = arith.constant 0x7F800000 : f32
    %106 = vector.broadcast %cst_36 : f32 to vector<8x128xf32>
    %107 = arith.select %105, %106, %96 : vector<8x128xi1>, vector<8x128xf32>
    %cst_37 = arith.constant dense<0x7F800000> : vector<8xf32>
    %108 = vector.multi_reduction <minimumf>, %107, %cst_37 [1] : vector<8x128xf32> to vector<8xf32>
    %109 = vector.shape_cast %108 : vector<8xf32> to vector<8x1xf32>
    %110 = vector.broadcast %109 : vector<8x1xf32> to vector<8x128xf32>
    %111 = arith.cmpf oeq, %107, %110 : vector<8x128xf32>
    %112 = arith.extui %111 : vector<8x128xi1> to vector<8x128xi32>
    %113 = arith.sitofp %112 : vector<8x128xi32> to vector<8x128xf32>
    %114 = arith.addf %103, %113 : vector<8x128xf32>
    %cst_38 = arith.constant 0.000000e+00 : f32
    %115 = vector.broadcast %cst_38 : f32 to vector<8x128xf32>
    %116 = arith.cmpf ogt, %113, %115 : vector<8x128xf32>
    %cst_39 = arith.constant 0x7F800000 : f32
    %117 = vector.broadcast %cst_39 : f32 to vector<8x128xf32>
    %118 = arith.select %116, %117, %107 : vector<8x128xi1>, vector<8x128xf32>
    %cst_40 = arith.constant dense<0x7F800000> : vector<8xf32>
    %119 = vector.multi_reduction <minimumf>, %118, %cst_40 [1] : vector<8x128xf32> to vector<8xf32>
    %120 = vector.shape_cast %119 : vector<8xf32> to vector<8x1xf32>
    %121 = vector.broadcast %120 : vector<8x1xf32> to vector<8x128xf32>
    %122 = arith.cmpf oeq, %118, %121 : vector<8x128xf32>
    %123 = arith.extui %122 : vector<8x128xi1> to vector<8x128xi32>
    %124 = arith.sitofp %123 : vector<8x128xi32> to vector<8x128xf32>
    %125 = arith.addf %114, %124 : vector<8x128xf32>
    %cst_41 = arith.constant 0.000000e+00 : f32
    %126 = vector.broadcast %cst_41 : f32 to vector<8x128xf32>
    %127 = arith.cmpf ogt, %124, %126 : vector<8x128xf32>
    %cst_42 = arith.constant 0x7F800000 : f32
    %128 = vector.broadcast %cst_42 : f32 to vector<8x128xf32>
    %129 = arith.select %127, %128, %118 : vector<8x128xi1>, vector<8x128xf32>
    %cst_43 = arith.constant dense<0x7F800000> : vector<8xf32>
    %130 = vector.multi_reduction <minimumf>, %129, %cst_43 [1] : vector<8x128xf32> to vector<8xf32>
    %131 = vector.shape_cast %130 : vector<8xf32> to vector<8x1xf32>
    %132 = vector.broadcast %131 : vector<8x1xf32> to vector<8x128xf32>
    %133 = arith.cmpf oeq, %129, %132 : vector<8x128xf32>
    %134 = arith.extui %133 : vector<8x128xi1> to vector<8x128xi32>
    %135 = arith.sitofp %134 : vector<8x128xi32> to vector<8x128xf32>
    %136 = arith.addf %125, %135 : vector<8x128xf32>
    %cst_44 = arith.constant 0.000000e+00 : f32
    %137 = vector.broadcast %cst_44 : f32 to vector<8x128xf32>
    %138 = arith.cmpf ogt, %135, %137 : vector<8x128xf32>
    %cst_45 = arith.constant 0x7F800000 : f32
    %139 = vector.broadcast %cst_45 : f32 to vector<8x128xf32>
    %140 = arith.select %138, %139, %129 : vector<8x128xi1>, vector<8x128xf32>
    %cst_46 = arith.constant dense<0x7F800000> : vector<8xf32>
    %141 = vector.multi_reduction <minimumf>, %140, %cst_46 [1] : vector<8x128xf32> to vector<8xf32>
    %142 = vector.shape_cast %141 : vector<8xf32> to vector<8x1xf32>
    %143 = vector.broadcast %142 : vector<8x1xf32> to vector<8x128xf32>
    %144 = arith.cmpf oeq, %140, %143 : vector<8x128xf32>
    %145 = arith.extui %144 : vector<8x128xi1> to vector<8x128xi32>
    %146 = arith.sitofp %145 : vector<8x128xi32> to vector<8x128xf32>
    %147 = arith.addf %136, %146 : vector<8x128xf32>
    %cst_47 = arith.constant 0.000000e+00 : f32
    %148 = vector.broadcast %cst_47 : f32 to vector<8x128xf32>
    %149 = arith.cmpf ogt, %146, %148 : vector<8x128xf32>
    %cst_48 = arith.constant 0x7F800000 : f32
    %150 = vector.broadcast %cst_48 : f32 to vector<8x128xf32>
    %151 = arith.select %149, %150, %140 : vector<8x128xi1>, vector<8x128xf32>
    %cst_49 = arith.constant dense<0x7F800000> : vector<8xf32>
    %152 = vector.multi_reduction <minimumf>, %151, %cst_49 [1] : vector<8x128xf32> to vector<8xf32>
    %153 = vector.shape_cast %152 : vector<8xf32> to vector<8x1xf32>
    %154 = vector.broadcast %153 : vector<8x1xf32> to vector<8x128xf32>
    %155 = arith.cmpf oeq, %151, %154 : vector<8x128xf32>
    %156 = arith.extui %155 : vector<8x128xi1> to vector<8x128xi32>
    %157 = arith.sitofp %156 : vector<8x128xi32> to vector<8x128xf32>
    %158 = arith.addf %147, %157 : vector<8x128xf32>
    %cst_50 = arith.constant 0.000000e+00 : f32
    %159 = vector.broadcast %cst_50 : f32 to vector<8x128xf32>
    %160 = arith.cmpf ogt, %157, %159 : vector<8x128xf32>
    %cst_51 = arith.constant 0x7F800000 : f32
    %161 = vector.broadcast %cst_51 : f32 to vector<8x128xf32>
    %162 = arith.select %160, %161, %151 : vector<8x128xi1>, vector<8x128xf32>
    %cst_52 = arith.constant dense<0x7F800000> : vector<8xf32>
    %163 = vector.multi_reduction <minimumf>, %162, %cst_52 [1] : vector<8x128xf32> to vector<8xf32>
    %164 = vector.shape_cast %163 : vector<8xf32> to vector<8x1xf32>
    %165 = vector.broadcast %164 : vector<8x1xf32> to vector<8x128xf32>
    %166 = arith.cmpf oeq, %162, %165 : vector<8x128xf32>
    %167 = arith.extui %166 : vector<8x128xi1> to vector<8x128xi32>
    %168 = arith.sitofp %167 : vector<8x128xi32> to vector<8x128xf32>
    %169 = arith.addf %158, %168 : vector<8x128xf32>
    %cst_53 = arith.constant 0.000000e+00 : f32
    %170 = vector.broadcast %cst_53 : f32 to vector<8x128xf32>
    %171 = arith.cmpf ogt, %168, %170 : vector<8x128xf32>
    %cst_54 = arith.constant 0x7F800000 : f32
    %172 = vector.broadcast %cst_54 : f32 to vector<8x128xf32>
    %173 = arith.select %171, %172, %162 : vector<8x128xi1>, vector<8x128xf32>
    %cst_55 = arith.constant dense<0x7F800000> : vector<8xf32>
    %174 = vector.multi_reduction <minimumf>, %173, %cst_55 [1] : vector<8x128xf32> to vector<8xf32>
    %175 = vector.shape_cast %174 : vector<8xf32> to vector<8x1xf32>
    %176 = vector.broadcast %175 : vector<8x1xf32> to vector<8x128xf32>
    %177 = arith.cmpf oeq, %173, %176 : vector<8x128xf32>
    %178 = arith.extui %177 : vector<8x128xi1> to vector<8x128xi32>
    %179 = arith.sitofp %178 : vector<8x128xi32> to vector<8x128xf32>
    %180 = arith.addf %169, %179 : vector<8x128xf32>
    %cst_56 = arith.constant 0.000000e+00 : f32
    %181 = vector.broadcast %cst_56 : f32 to vector<8x128xf32>
    %182 = arith.cmpf ogt, %179, %181 : vector<8x128xf32>
    %cst_57 = arith.constant 0x7F800000 : f32
    %183 = vector.broadcast %cst_57 : f32 to vector<8x128xf32>
    %184 = arith.select %182, %183, %173 : vector<8x128xi1>, vector<8x128xf32>
    %cst_58 = arith.constant dense<0x7F800000> : vector<8xf32>
    %185 = vector.multi_reduction <minimumf>, %184, %cst_58 [1] : vector<8x128xf32> to vector<8xf32>
    %186 = vector.shape_cast %185 : vector<8xf32> to vector<8x1xf32>
    %187 = vector.broadcast %186 : vector<8x1xf32> to vector<8x128xf32>
    %188 = arith.cmpf oeq, %184, %187 : vector<8x128xf32>
    %189 = arith.extui %188 : vector<8x128xi1> to vector<8x128xi32>
    %190 = arith.sitofp %189 : vector<8x128xi32> to vector<8x128xf32>
    %191 = arith.addf %180, %190 : vector<8x128xf32>
    %cst_59 = arith.constant dense<0.000000e+00> : vector<128x128xf32>
    %192 = tpu.matmul %37, %191, %cst_59 {dimension_numbers = #tpu.dot_dimension_numbers<[0], [0], [1], [1], [0, 1, 1, 1], [], []>} : vector<8x128xf32>, vector<8x128xf32>, vector<128x128xf32> -> vector<128x128xf32>
    %193 = tpu.iota {dimensions = array<i32: 0>} : vector<128x128xi32>
    %194 = tpu.iota {dimensions = array<i32: 1>} : vector<128x128xi32>
    %195 = arith.cmpi eq, %193, %194 : vector<128x128xi32>
    %196 = arith.extui %195 : vector<128x128xi1> to vector<128x128xi32>
    %197 = arith.sitofp %196 : vector<128x128xi32> to vector<128x128xf32>
    %198 = arith.mulf %192, %197 : vector<128x128xf32>
    %cst_60 = arith.constant dense<0.000000e+00> : vector<128xf32>
    %199 = vector.multi_reduction <add>, %198, %cst_60 [1] : vector<128x128xf32> to vector<128xf32>
    %200 = vector.shape_cast %199 : vector<128xf32> to vector<128x1xf32>
    %cst_61 = arith.constant 0.000000e+00 : f32
    %201 = vector.broadcast %cst_61 : f32 to vector<128x128xf32>
    %202 = arith.cmpf ogt, %192, %201 : vector<128x128xf32>
    %203 = arith.extui %202 : vector<128x128xi1> to vector<128x128xi32>
    %204 = arith.sitofp %203 : vector<128x128xi32> to vector<128x128xf32>
    %205 = vector.broadcast %200 : vector<128x1xf32> to vector<128x128xf32>
    %206 = arith.subf %205, %192 : vector<128x128xf32>
    %cst_62 = arith.constant 0.000000e+00 : f32
    %207 = vector.broadcast %cst_62 : f32 to vector<128x128xf32>
    %208 = arith.maximumf %206, %207 : vector<128x128xf32>
    %209 = arith.maximumf %3, %204 : vector<128x128xf32>
    %cst_63 = arith.constant -0.105360515 : f32
    %210 = vector.broadcast %cst_63 : f32 to vector<128x128xf32>
    %211 = arith.mulf %208, %210 : vector<128x128xf32>
    %212 = math.exp %211 : vector<128x128xf32>
    %213 = arith.mulf %209, %212 : vector<128x128xf32>
    %cst_64 = arith.constant 0.34867844 : f32
    %214 = vector.broadcast %cst_64 : f32 to vector<128x128xf32>
    %215 = arith.cmpf oge, %213, %214 : vector<128x128xf32>
    %216 = arith.extui %215 : vector<128x128xi1> to vector<128x128xi32>
    %217 = arith.sitofp %216 : vector<128x128xi32> to vector<128x128xf32>
    %218 = arith.mulf %213, %217 : vector<128x128xf32>
    %cst_65 = arith.constant dense<0.000000e+00> : vector<8x128xf32>
    %219 = tpu.matmul %10, %218, %cst_65 {dimension_numbers = #tpu.dot_dimension_numbers<[1], [0], [0], [1], [0, 0, 1, 1], [], []>} : vector<8x128xf32>, vector<128x128xf32>, vector<8x128xf32> -> vector<8x128xf32>
    %cst_66 = arith.constant dense<0.000000e+00> : vector<8x128xf32>
    %220 = tpu.matmul %10, %4, %cst_66 {dimension_numbers = #tpu.dot_dimension_numbers<[1], [0], [0], [1], [0, 0, 1, 1], [], []>} : vector<8x128xf32>, vector<128x128xf32>, vector<8x128xf32> -> vector<8x128xf32>
    %cst_67 = arith.constant 0.000000e+00 : f32
    %221 = vector.broadcast %cst_67 : f32 to vector<8x128xf32>
    %222 = arith.cmpf ogt, %219, %221 : vector<8x128xf32>
    %cst_68 = arith.constant 1.000000e+00 : f32
    %223 = vector.broadcast %cst_68 : f32 to vector<8x128xf32>
    %224 = arith.cmpf olt, %220, %223 : vector<8x128xf32>
    %225 = arith.andi %222, %224 : vector<8x128xi1>
    %226 = arith.extui %225 : vector<8x128xi1> to vector<8x128xi32>
    %227 = arith.sitofp %226 : vector<8x128xi32> to vector<8x128xf32>
    %228 = arith.mulf %10, %25 : vector<8x128xf32>
    %cst_69 = arith.constant dense<0.000000e+00> : vector<8xf32>
    %229 = vector.multi_reduction <add>, %228, %cst_69 [1] : vector<8x128xf32> to vector<8xf32>
    %230 = vector.shape_cast %229 : vector<8xf32> to vector<8x1xf32>
    %231 = arith.mulf %25, %227 : vector<8x128xf32>
    %cst_70 = arith.constant -1.000000e-03 : f32
    %232 = vector.broadcast %cst_70 : f32 to vector<8x128xf32>
    %233 = arith.mulf %232, %231 : vector<8x128xf32>
    %234 = math.exp %233 : vector<8x128xf32>
    %cst_71 = arith.constant 0.000000e+00 : f32
    %235 = vector.broadcast %cst_71 : f32 to vector<8x128xf32>
    %236 = arith.cmpf ogt, %231, %235 : vector<8x128xf32>
    %237 = arith.extui %236 : vector<8x128xi1> to vector<8x128xi32>
    %238 = arith.sitofp %237 : vector<8x128xi32> to vector<8x128xf32>
    %239 = arith.mulf %234, %238 : vector<8x128xf32>
    %cst_72 = arith.constant dense<0.000000e+00> : vector<8xf32>
    %240 = vector.multi_reduction <add>, %239, %cst_72 [1] : vector<8x128xf32> to vector<8xf32>
    %241 = vector.shape_cast %240 : vector<8xf32> to vector<8x1xf32>
    %cst_73 = arith.constant 0.000000e+00 : f32
    %242 = vector.broadcast %cst_73 : f32 to vector<8x1xf32>
    %243 = arith.cmpf ogt, %241, %242 : vector<8x1xf32>
    %cst_74 = arith.constant 1.000000e+00 : f32
    %244 = vector.broadcast %cst_74 : f32 to vector<8x1xf32>
    %245 = arith.select %243, %241, %244 : vector<8x1xi1>, vector<8x1xf32>
    %246 = tpu.reciprocal %245 {approx = true} : vector<8x1xf32> -> vector<8x1xf32>
    %247 = vector.broadcast %246 : vector<8x1xf32> to vector<8x128xf32>
    %248 = arith.mulf %239, %247 : vector<8x128xf32>
    %249 = arith.mulf %248, %231 : vector<8x128xf32>
    %cst_75 = arith.constant dense<0.000000e+00> : vector<8xf32>
    %250 = vector.multi_reduction <add>, %249, %cst_75 [1] : vector<8x128xf32> to vector<8xf32>
    %251 = vector.shape_cast %250 : vector<8xf32> to vector<8x1xf32>
    %252 = arith.subf %230, %251 : vector<8x1xf32>
    %cst_76 = arith.constant 0.000000e+00 : f32
    %253 = vector.broadcast %cst_76 : f32 to vector<8x1xf32>
    %254 = arith.maximumf %252, %253 : vector<8x1xf32>
    %255 = vector.shape_cast %254 : vector<8x1xf32> to vector<1x8x1xf32>
    %cst_77 = arith.constant dense<0.000000e+00> : vector<1xf32>
    %256 = vector.multi_reduction <add>, %255, %cst_77 [1, 2] : vector<1x8x1xf32> to vector<1xf32>
    %257 = vector.shape_cast %256 : vector<1xf32> to vector<1x1x1xf32>
    %258 = vector.extract %257[0, 0, 0] : f32 from vector<1x1x1xf32>
    %cst_78 = arith.constant 1.250000e-01 : f32
    %259 = arith.mulf %258, %cst_78 : f32
    %c0_79 = arith.constant 0 : index
    %c0_80 = arith.constant 0 : index
    %260 = memref.load %arg5[%c0_79, %c0_80] : memref<1x1xf32, #tpu.memory_space<smem>>
    memref.store %259, %arg5[%c0_79, %c0_80] : memref<1x1xf32, #tpu.memory_space<smem>>
    %261 = tpu.transpose %218, [1, 0] : vector<128x128xf32> -> vector<128x128xf32>
    %262 = arith.addf %218, %261 : vector<128x128xf32>
    %cst_81 = arith.constant 5.000000e-01 : f32
    %263 = vector.broadcast %cst_81 : f32 to vector<128x128xf32>
    %264 = arith.mulf %262, %263 : vector<128x128xf32>
    %c0_82 = arith.constant 0 : index
    %c0_83 = arith.constant 0 : index
    %265 = vector.load %arg6[%c0_82, %c0_83] : memref<128x128xf32, #tpu.memory_space<vmem>>, vector<128x128xf32>
    tpu.vector_store %arg6[%c0_82, %c0_83], %264 {strides = array<i32>} : memref<128x128xf32, #tpu.memory_space<vmem>>, vector<128x128xf32>,
    return
  }
}

</mosaic_0001>

<llo_original>
// kernel: navq_forward.1
$region0: #{navq_forward.1}
  #allocation0 [shape = 'u32[]', space=smem, size = 0x4, offset = 0x4, fixed_abs, tag = 'smem constant byte address 0x4 - core index']
  #allocation1 [shape = 'u32[144,128]{1,0:T(1,128)}', space=vmem, size = 0x12000, scoped, tag = 'internal scratch']
  %s0 = inlined_call_operand.vmem [shape: f32[8,32], index: 0, kind: input, shape index: {}]
  %s1 = inlined_call_operand.vmem [shape: f32[128,32], index: 1, kind: input, shape index: {}]
  %s2 = inlined_call_operand.vmem [shape: s32[8,1], index: 2, kind: input, shape index: {}]
  %s3 = inlined_call_operand.vmem [shape: f32[128,128], index: 3, kind: input, shape index: {}]
  %s4 = inlined_call_operand.hbm [shape: f32[128,128], index: 4, kind: input, shape index: {}]
  %s5 = inlined_call_operand.hbm [shape: f32[1,1], index: 5, kind: output, shape index: {0}]
  %s6 = inlined_call_operand.hbm [shape: f32[128,128], index: 6, kind: output, shape index: {1}]
  %7 = xla_tuple %s5, %s6
  %s8 = sld [smem:[#allocation0]]
  $region42: #{navq_forward.1} parent=0
    _
  %s10 = ssub.s32 1, %s8
  %s11 = scalar_select 0, %s10, %s8
  $region1: #{navq_forward.1} parent=0
    #allocation2 [shape = 'u8[65536]{0}', space=vmem, size = 0x10000, scoped, tag = 'input window, operand 4, single buffered']
    #allocation3 [shape = 's32[1]{0}', space=sflag, size = 0x4, scoped, tag = 'scoped memory for navq_forward.1']
    #allocation4 [shape = 's32[1]{0}', space=sflag, size = 0x4, scoped, tag = 'scoped memory for navq_forward.1']
    #allocation5 [shape = 's32[1]{0}', space=sflag, size = 0x4, scoped, tag = 'scoped memory for navq_forward.1']
    #allocation6 [shape = 'u8[512]{0}', space=smem, size = 0x200, scoped, tag = 'output window, operand 0, single buffered']
    #allocation7 [shape = 'u8[65536]{0}', space=vmem, size = 0x10000, scoped, tag = 'output window, operand 1, single buffered']
    %12 = vsyncpa [#allocation3], 0
    %13 = vsyncpa [#allocation5], 0
    %14 = vsyncpa [#allocation4], 0
    // Predicated region
    $region2: #{navq_forward.1} parent=1 // pred_check
      _
    $region3: #{navq_forward.1} parent=1 // pred_check_branch
      %16 = sbr.rel (0) target = $region5
    $region4: #{navq_forward.1} parent=1 // pred_region
      _
    $region5: #{navq_forward.1} parent=1 // pred_fallthru
      _
    // Predicated region
    $region6: #{navq_forward.1} parent=1 // pred_check
      _
    $region7: #{navq_forward.1} parent=1 // pred_check_branch
      %18 = sbr.rel (0) target = $region9
    $region8: #{navq_forward.1} parent=1 // pred_region
      _
    $region9: #{navq_forward.1} parent=1 // pred_fallthru
      _
    // Predicated region
    $region10: #{navq_forward.1} parent=1 // pred_check
      _
    $region11: #{navq_forward.1} parent=1 // pred_check_branch
      %20 = sbr.rel (0) target = $region13
    $region12: #{navq_forward.1} parent=1 // pred_region
      _
    $region13: #{navq_forward.1} parent=1 // pred_fallthru
      _
    // Predicated region
    $region14: #{navq_forward.1} parent=1 // pred_check
      _
    $region15: #{navq_forward.1} parent=1 // pred_check_branch
      %22 = sbr.rel (0) target = $region17
    $region16: #{navq_forward.1} parent=1 // pred_region
      _
    $region17: #{navq_forward.1} parent=1 // pred_fallthru
      _
    // Predicated region
    $region18: #{navq_forward.1} parent=1 // pred_check
      _
    $region19: #{navq_forward.1} parent=1 // pred_check_branch
      %24 = sbr.rel (0) target = $region21
    $region20: #{navq_forward.1} parent=1 // pred_region
      %s26 = ssub.s32 2048, 2048
      %27 = vsyncadd [#allocation3], %s26
      %s28 = sshll.u32 [#allocation2], 4
      %s29 = int_to_ptr.vmem [resolvable:$true] %s28
      %34 = dma.hbm_to_vmem [thread:$0]  %s4, 2048, %s29, [#allocation3], 128, 128, 8
    $region21: #{navq_forward.1} parent=1 // pred_fallthru
      _
    // Predicated region
    $region22: #{navq_forward.1} parent=1 // pred_check
      _
    $region23: #{navq_forward.1} parent=1 // pred_check_branch
      %36 = sbr.rel (0) target = $region25
    $region24: #{navq_forward.1} parent=1 // pred_region
      %37 = dma.done [#allocation3], 2048
    $region25: #{navq_forward.1} parent=1 // pred_fallthru
      _
    %v38 = vld [vmem:[%s0] sm:$0xff]
    %v39 = vld [vmem:[%s1] sm:$0xff]
    %v40 = vld [vmem:[%s1 + $0x8] sm:$0xff]
    %v41 = vld [vmem:[%s1 + $0x10] sm:$0xff]
    %v42 = vld [vmem:[%s1 + $0x18] sm:$0xff]
    %v43 = vld [vmem:[%s1 + $0x20] sm:$0xff]
    %v44 = vld [vmem:[%s1 + $0x28] sm:$0xff]
    %v45 = vld [vmem:[%s1 + $0x30] sm:$0xff]
    %v46 = vld [vmem:[%s1 + $0x38] sm:$0xff]
    %v47 = vld [vmem:[%s1 + $0x40] sm:$0xff]
    %v48 = vld [vmem:[%s1 + $0x48] sm:$0xff]
    %v49 = vld [vmem:[%s1 + $0x50] sm:$0xff]
    %v50 = vld [vmem:[%s1 + $0x58] sm:$0xff]
    %v51 = vld [vmem:[%s1 + $0x60] sm:$0xff]
    %v52 = vld [vmem:[%s1 + $0x68] sm:$0xff]
    %v53 = vld [vmem:[%s1 + $0x70] sm:$0xff]
    %v54 = vld [vmem:[%s1 + $0x78] sm:$0xff]
    %v55 = vld [vmem:[%s2] sm:$0xff]
    %v56 = vld [vmem:[%s3] sm:$0xff]
    %v57 = vld [vmem:[%s3 + $0x8] sm:$0xff]
    %v58 = vld [vmem:[%s3 + $0x10] sm:$0xff]
    %v59 = vld [vmem:[%s3 + $0x18] sm:$0xff]
    %v60 = vld [vmem:[%s3 + $0x20] sm:$0xff]
    %v61 = vld [vmem:[%s3 + $0x28] sm:$0xff]
    %v62 = vld [vmem:[%s3 + $0x30] sm:$0xff]
    %v63 = vld [vmem:[%s3 + $0x38] sm:$0xff]
    %v64 = vld [vmem:[%s3 + $0x40] sm:$0xff]
    %v65 = vld [vmem:[%s3 + $0x48] sm:$0xff]
    %v66 = vld [vmem:[%s3 + $0x50] sm:$0xff]
    %v67 = vld [vmem:[%s3 + $0x58] sm:$0xff]
    %v68 = vld [vmem:[%s3 + $0x60] sm:$0xff]
    %v69 = vld [vmem:[%s3 + $0x68] sm:$0xff]
    %v70 = vld [vmem:[%s3 + $0x70] sm:$0xff]
    %v71 = vld [vmem:[%s3 + $0x78] sm:$0xff]
    %v72 = vld [vmem:[#allocation2] sm:$0xff]
    %v73 = vld [vmem:[#allocation2 + $0x8] sm:$0xff]
    %v74 = vld [vmem:[#allocation2 + $0x10] sm:$0xff]
    %v75 = vld [vmem:[#allocation2 + $0x18] sm:$0xff]
    %v76 = vld [vmem:[#allocation2 + $0x20] sm:$0xff]
    %v77 = vld [vmem:[#allocation2 + $0x28] sm:$0xff]
    %v78 = vld [vmem:[#allocation2 + $0x30] sm:$0xff]
    %v79 = vld [vmem:[#allocation2 + $0x38] sm:$0xff]
    %v80 = vld [vmem:[#allocation2 + $0x40] sm:$0xff]
    %v81 = vld [vmem:[#allocation2 + $0x48] sm:$0xff]
    %v82 = vld [vmem:[#allocation2 + $0x50] sm:$0xff]
    %v83 = vld [vmem:[#allocation2 + $0x58] sm:$0xff]
    %v84 = vld [vmem:[#allocation2 + $0x60] sm:$0xff]
    %v85 = vld [vmem:[#allocation2 + $0x68] sm:$0xff]
    %v86 = vld [vmem:[#allocation2 + $0x70] sm:$0xff]
    %v87 = vld [vmem:[#allocation2 + $0x78] sm:$0xff]
    %v88 = vlaneseq
    %v89 = vand.u32 %v88, 127
    %v90 = vcvt.s32.f32 %v89
    %91 = vset.pattern.permute.xlu0 0
    %92 = vperm.xlu0 %91, %v55
    %v93 = vpop.permute.xlu0 %92
    %vm94 = vcmp.eq.s32.totalorder %v89, %v93
    %v95 = vsel %vm94, 1, 0
    %v96 = vcvt.s32.f32 %v95
    %v97 = vmul.f32 %v38, %v38
    %vm98 = vcmask 261120
    %v99 = vsel %vm98, %v97, 0.0
    %100 = vadd.xlane.f32.xlu0 %v99
    %v101 = vpop.xlane.xlu0 %100
    %v102 = vmul.f32 %v39, %v39
    %v103 = vmul.f32 %v40, %v40
    %v104 = vmul.f32 %v41, %v41
    %v105 = vmul.f32 %v42, %v42
    %v106 = vmul.f32 %v43, %v43
    %v107 = vmul.f32 %v44, %v44
    %v108 = vmul.f32 %v45, %v45
    %v109 = vmul.f32 %v46, %v46
    %v110 = vmul.f32 %v47, %v47
    %v111 = vmul.f32 %v48, %v48
    %v112 = vmul.f32 %v49, %v49
    %v113 = vmul.f32 %v50, %v50
    %v114 = vmul.f32 %v51, %v51
    %v115 = vmul.f32 %v52, %v52
    %v116 = vmul.f32 %v53, %v53
    %v117 = vmul.f32 %v54, %v54
    %v119 = vsel %vm98, 1.0, 0
    %v122 = vsel %vm98, %v102, 0
    %v125 = vsel %vm98, %v103, 0
    %v128 = vsel %vm98, %v104, 0
    %v131 = vsel %vm98, %v105, 0
    %v134 = vsel %vm98, %v106, 0
    %v137 = vsel %vm98, %v107, 0
    %v140 = vsel %vm98, %v108, 0
    %v143 = vsel %vm98, %v109, 0
    %v146 = vsel %vm98, %v110, 0
    %v149 = vsel %vm98, %v111, 0
    %v152 = vsel %vm98, %v112, 0
    %v155 = vsel %vm98, %v113, 0
    %v158 = vsel %vm98, %v114, 0
    %v161 = vsel %vm98, %v115, 0
    %v164 = vsel %vm98, %v116, 0
    %v167 = vsel %vm98, %v117, 0
    %169 = vmatprep.subr.mxu0 0.0
    %170 = vmatpush1.xpose.msra.mxu0 %v122
    %171 = vmatprep.subr.mxu0 0.0
    %172 = vmatpush1.xpose.msra.mxu0 %v125
    %173 = vmatprep.subr.mxu0 0.0
    %174 = vmatpush1.xpose.msra.mxu0 %v128
    %175 = vmatprep.subr.mxu0 0.0
    %176 = vmatpush1.xpose.msra.mxu0 %v131
    %177 = vmatprep.subr.mxu0 0.0
    %178 = vmatpush1.xpose.msra.mxu0 %v134
    %179 = vmatprep.subr.mxu0 0.0
    %180 = vmatpush1.xpose.msra.mxu0 %v137
    %181 = vmatprep.subr.mxu0 0.0
    %182 = vmatpush1.xpose.msra.mxu0 %v140
    %183 = vmatprep.subr.mxu0 0.0
    %184 = vmatpush1.xpose.msra.mxu0 %v143
    %185 = vmatprep.subr.mxu0 0.0
    %186 = vmatpush1.xpose.msra.mxu0 %v146
    %187 = vmatprep.subr.mxu0 0.0
    %188 = vmatpush1.xpose.msra.mxu0 %v149
    %189 = vmatprep.subr.mxu0 0.0
    %190 = vmatpush1.xpose.msra.mxu0 %v152
    %191 = vmatprep.subr.mxu0 0.0
    %192 = vmatpush1.xpose.msra.mxu0 %v155
    %193 = vmatprep.subr.mxu0 0.0
    %194 = vmatpush1.xpose.msra.mxu0 %v158
    %195 = vmatprep.subr.mxu0 0.0
    %196 = vmatpush1.xpose.msra.mxu0 %v161
    %197 = vmatprep.subr.mxu0 0.0
    %198 = vmatpush1.xpose.msra.mxu0 %v164
    %199 = vmatprep.subr.mxu0 0.0
    %200 = vmatpush1.xpose.msra.mxu0 %v167
    %201 = vmatprep.subr.mxu0 0.0
    %202 = vmatpush1.xpose.msra.mxu0 0.0
    %203 = vmatprep.subr.mxu0 0.0
    %204 = vmatpush1.xpose.msra.mxu0 0.0
    %205 = vmatprep.subr.mxu0 0.0
    %206 = vmatpush1.xpose.msra.mxu0 0.0
    %207 = vmatprep.subr.mxu0 0.0
    %208 = vmatpush1.xpose.msra.mxu0 0.0
    %209 = vmatprep.subr.mxu0 0.0
    %210 = vmatpush1.xpose.msra.mxu0 0.0
    %211 = vmatprep.subr.mxu0 0.0
    %212 = vmatpush1.xpose.msra.mxu0 0.0
    %213 = vmatprep.subr.mxu0 0.0
    %214 = vmatpush1.xpose.msra.mxu0 0.0
    %215 = vmatprep.subr.mxu0 0.0
    %216 = vmatpush1.xpose.msra.mxu0 0.0
    %217 = vmatprep.subr.mxu0 0.0
    %218 = vmatpush1.xpose.msra.mxu0 0.0
    %219 = vmatprep.subr.mxu0 0.0
    %220 = vmatpush1.xpose.msra.mxu0 0.0
    %221 = vmatprep.subr.mxu0 0.0
    %222 = vmatpush1.xpose.msra.mxu0 0.0
    %223 = vmatprep.subr.mxu0 0.0
    %224 = vmatpush1.xpose.msra.mxu0 0.0
    %225 = vmatprep.subr.mxu0 0.0
    %226 = vmatpush1.xpose.msra.mxu0 0.0
    %227 = vmatprep.subr.mxu0 0.0
    %228 = vmatpush1.xpose.msra.mxu0 0.0
    %229 = vmatprep.subr.mxu0 0.0
    %230 = vmatpush1.xpose.msra.mxu0 0.0
    %231 = vmatprep.subr.mxu0 0.0
    %232 = vmatpush1.xpose.msra.mxu0 0.0
    %233 = vmatprep.mubr.f32.mxu0 0.0
    %234 = vmatmul.mubr.f32.gmra.mrb[0].mxu0 %v119
    %v235 = vpop.f32.mrb[0].mxu0
    %v236 = vadd.f32 0.0, %v235
    %v237 = vpop.f32.mrb[0].mxu0
    %238 = vdwg.mxu0
    %v240 = vsel %vm98, %v38, 0
    %v243 = vsel %vm98, %v39, 0
    %v246 = vsel %vm98, %v40, 0
    %v249 = vsel %vm98, %v41, 0
    %v252 = vsel %vm98, %v42, 0
    %v255 = vsel %vm98, %v43, 0
    %v258 = vsel %vm98, %v44, 0
    %v261 = vsel %vm98, %v45, 0
    %v264 = vsel %vm98, %v46, 0
    %v267 = vsel %vm98, %v47, 0
    %v270 = vsel %vm98, %v48, 0
    %v273 = vsel %vm98, %v49, 0
    %v276 = vsel %vm98, %v50, 0
    %v279 = vsel %vm98, %v51, 0
    %v282 = vsel %vm98, %v52, 0
    %v285 = vsel %vm98, %v53, 0
    %v288 = vsel %vm98, %v54, 0
    %290 = vmatprep.subr.mxu0 0.0
    %291 = vmatpush1.xpose.msra.mxu0 %v243
    %292 = vmatprep.subr.mxu0 0.0
    %293 = vmatpush1.xpose.msra.mxu0 %v246
    %294 = vmatprep.subr.mxu0 0.0
    %295 = vmatpush1.xpose.msra.mxu0 %v249
    %296 = vmatprep.subr.mxu0 0.0
    %297 = vmatpush1.xpose.msra.mxu0 %v252
    %298 = vmatprep.subr.mxu0 0.0
    %299 = vmatpush1.xpose.msra.mxu0 %v255
    %300 = vmatprep.subr.mxu0 0.0
    %301 = vmatpush1.xpose.msra.mxu0 %v258
    %302 = vmatprep.subr.mxu0 0.0
    %303 = vmatpush1.xpose.msra.mxu0 %v261
    %304 = vmatprep.subr.mxu0 0.0
    %305 = vmatpush1.xpose.msra.mxu0 %v264
    %306 = vmatprep.subr.mxu0 0.0
    %307 = vmatpush1.xpose.msra.mxu0 %v267
    %308 = vmatprep.subr.mxu0 0.0
    %309 = vmatpush1.xpose.msra.mxu0 %v270
    %310 = vmatprep.subr.mxu0 0.0
    %311 = vmatpush1.xpose.msra.mxu0 %v273
    %312 = vmatprep.subr.mxu0 0.0
    %313 = vmatpush1.xpose.msra.mxu0 %v276
    %314 = vmatprep.subr.mxu0 0.0
    %315 = vmatpush1.xpose.msra.mxu0 %v279
    %316 = vmatprep.subr.mxu0 0.0
    %317 = vmatpush1.xpose.msra.mxu0 %v282
    %318 = vmatprep.subr.mxu0 0.0
    %319 = vmatpush1.xpose.msra.mxu0 %v285
    %320 = vmatprep.subr.mxu0 0.0
    %321 = vmatpush1.xpose.msra.mxu0 %v288
    %322 = vmatprep.subr.mxu0 0.0
    %323 = vmatpush1.xpose.msra.mxu0 0.0
    %324 = vmatprep.subr.mxu0 0.0
    %325 = vmatpush1.xpose.msra.mxu0 0.0
    %326 = vmatprep.subr.mxu0 0.0
    %327 = vmatpush1.xpose.msra.mxu0 0.0
    %328 = vmatprep.subr.mxu0 0.0
    %329 = vmatpush1.xpose.msra.mxu0 0.0
    %330 = vmatprep.subr.mxu0 0.0
    %331 = vmatpush1.xpose.msra.mxu0 0.0
    %332 = vmatprep.subr.mxu0 0.0
    %333 = vmatpush1.xpose.msra.mxu0 0.0
    %334 = vmatprep.subr.mxu0 0.0
    %335 = vmatpush1.xpose.msra.mxu0 0.0
    %336 = vmatprep.subr.mxu0 0.0
    %337 = vmatpush1.xpose.msra.mxu0 0.0
    %338 = vmatprep.subr.mxu0 0.0
    %339 = vmatpush1.xpose.msra.mxu0 0.0
    %340 = vmatprep.subr.mxu0 0.0
    %341 = vmatpush1.xpose.msra.mxu0 0.0
    %342 = vmatprep.subr.mxu0 0.0
    %343 = vmatpush1.xpose.msra.mxu0 0.0
    %344 = vmatprep.subr.mxu0 0.0
    %345 = vmatpush1.xpose.msra.mxu0 0.0
    %346 = vmatprep.subr.mxu0 0.0
    %347 = vmatpush1.xpose.msra.mxu0 0.0
    %348 = vmatprep.subr.mxu0 0.0
    %349 = vmatpush1.xpose.msra.mxu0 0.0
    %350 = vmatprep.subr.mxu0 0.0
    %351 = vmatpush1.xpose.msra.mxu0 0.0
    %352 = vmatprep.subr.mxu0 0.0
    %353 = vmatpush1.xpose.msra.mxu0 0.0
    %354 = vmatprep.mubr.f32.mxu0 0.0
    %355 = vmatmul.mubr.f32.gmra.mrb[0].mxu0 %v240
    %v356 = vpop.f32.mrb[0].mxu0
    %v357 = vadd.f32 0.0, %v356
    %v358 = vpop.f32.mrb[0].mxu0
    %359 = vdwg.mxu0
    %v360 = vlaneseq
    %v361 = vshrl.u32 %v360, 7
    %v362 = vsub.s32 0, %v361
    %v363 = vrot.slane %v236, %v362
    %v364 = vadd.f32 %v101, %v363
    %v365 = vmul.f32 %v357, 2.0
    %v366 = vsub.f32 %v364, %v365
    %v367 = vmax.f32 %v366, 0.0
    %368 = vmin.xlane.f32.xlu0 %v367
    %v369 = vpop.xlane.xlu0 %368
    %vm370 = vcmp.eq.f32.partialorder %v367, %v369
    %v371 = vsel %vm370, %v90, 128.0
    %372 = vmin.xlane.f32.xlu0 %v371
    %v373 = vpop.xlane.xlu0 %372
    %vm374 = vcmp.eq.f32.partialorder %v90, %v373
    %v375 = vsel %vm374, 1, 0
    %v376 = vcvt.s32.f32 %v375
    %vm377 = vcmp.gt.f32.partialorder %v376, 0.0
    %v378 = vsel %vm377, inf, %v367
    %379 = vmin.xlane.f32.xlu0 %v378
    %v380 = vpop.xlane.xlu0 %379
    %vm381 = vcmp.eq.f32.partialorder %v378, %v380
    %v382 = vsel %vm381, 1, 0
    %v383 = vcvt.s32.f32 %v382
    %v384 = vadd.f32 %v376, %v383
    %vm385 = vcmp.gt.f32.partialorder %v383, 0.0
    %v386 = vsel %vm385, inf, %v378
    %387 = vmin.xlane.f32.xlu0 %v386
    %v388 = vpop.xlane.xlu0 %387
    %vm389 = vcmp.eq.f32.partialorder %v386, %v388
    %v390 = vsel %vm389, 1, 0
    %v391 = vcvt.s32.f32 %v390
    %v392 = vadd.f32 %v384, %v391
    %vm393 = vcmp.gt.f32.partialorder %v391, 0.0
    %v394 = vsel %vm393, inf, %v386
    %395 = vmin.xlane.f32.xlu0 %v394
    %v396 = vpop.xlane.xlu0 %395
    %vm397 = vcmp.eq.f32.partialorder %v394, %v396
    %v398 = vsel %vm397, 1, 0
    %v399 = vcvt.s32.f32 %v398
    %v400 = vadd.f32 %v392, %v399
    %vm401 = vcmp.gt.f32.partialorder %v399, 0.0
    %v402 = vsel %vm401, inf, %v394
    %403 = vmin.xlane.f32.xlu0 %v402
    %v404 = vpop.xlane.xlu0 %403
    %vm405 = vcmp.eq.f32.partialorder %v402, %v404
    %v406 = vsel %vm405, 1, 0
    %v407 = vcvt.s32.f32 %v406
    %v408 = vadd.f32 %v400, %v407
    %vm409 = vcmp.gt.f32.partialorder %v407, 0.0
    %v410 = vsel %vm409, inf, %v402
    %411 = vmin.xlane.f32.xlu0 %v410
    %v412 = vpop.xlane.xlu0 %411
    %vm413 = vcmp.eq.f32.partialorder %v410, %v412
    %v414 = vsel %vm413, 1, 0
    %v415 = vcvt.s32.f32 %v414
    %v416 = vadd.f32 %v408, %v415
    %vm417 = vcmp.gt.f32.partialorder %v415, 0.0
    %v418 = vsel %vm417, inf, %v410
    %419 = vmin.xlane.f32.xlu0 %v418
    %v420 = vpop.xlane.xlu0 %419
    %vm421 = vcmp.eq.f32.partialorder %v418, %v420
    %v422 = vsel %vm421, 1, 0
    %v423 = vcvt.s32.f32 %v422
    %v424 = vadd.f32 %v416, %v423
    %vm425 = vcmp.gt.f32.partialorder %v423, 0.0
    %v426 = vsel %vm425, inf, %v418
    %427 = vmin.xlane.f32.xlu0 %v426
    %v428 = vpop.xlane.xlu0 %427
    %vm429 = vcmp.eq.f32.partialorder %v426, %v428
    %v430 = vsel %vm429, 1, 0
    %v431 = vcvt.s32.f32 %v430
    %v432 = vadd.f32 %v424, %v431
    %vm433 = vcmp.gt.f32.partialorder %v431, 0.0
    %v434 = vsel %vm433, inf, %v426
    %435 = vmin.xlane.f32.xlu0 %v434
    %v436 = vpop.xlane.xlu0 %435
    %vm437 = vcmp.eq.f32.partialorder %v434, %v436
    %v438 = vsel %vm437, 1, 0
    %v439 = vcvt.s32.f32 %v438
    %v440 = vadd.f32 %v432, %v439
    %vm441 = vcmp.gt.f32.partialorder %v439, 0.0
    %v442 = vsel %vm441, inf, %v434
    %443 = vmin.xlane.f32.xlu0 %v442
    %v444 = vpop.xlane.xlu0 %443
    %vm445 = vcmp.eq.f32.partialorder %v442, %v444
    %v446 = vsel %vm445, 1, 0
    %v447 = vcvt.s32.f32 %v446
    %v448 = vadd.f32 %v440, %v447
    %vm449 = vcmp.gt.f32.partialorder %v447, 0.0
    %v450 = vsel %vm449, inf, %v442
    %451 = vmin.xlane.f32.xlu0 %v450
    %v452 = vpop.xlane.xlu0 %451
    %vm453 = vcmp.eq.f32.partialorder %v450, %v452
    %v454 = vsel %vm453, 1, 0
    %v455 = vcvt.s32.f32 %v454
    %v456 = vadd.f32 %v448, %v455
    %vm457 = vcmp.gt.f32.partialorder %v455, 0.0
    %v458 = vsel %vm457, inf, %v450
    %459 = vmin.xlane.f32.xlu0 %v458
    %v460 = vpop.xlane.xlu0 %459
    %vm461 = vcmp.eq.f32.partialorder %v458, %v460
    %v462 = vsel %vm461, 1, 0
    %v463 = vcvt.s32.f32 %v462
    %v464 = vadd.f32 %v456, %v463
    %vm465 = vcmp.gt.f32.partialorder %v463, 0.0
    %v466 = vsel %vm465, inf, %v458
    %467 = vmin.xlane.f32.xlu0 %v466
    %v468 = vpop.xlane.xlu0 %467
    %vm469 = vcmp.eq.f32.partialorder %v466, %v468
    %v470 = vsel %vm469, 1, 0
    %v471 = vcvt.s32.f32 %v470
    %v472 = vadd.f32 %v464, %v471
    %vm473 = vcmp.gt.f32.partialorder %v471, 0.0
    %v474 = vsel %vm473, inf, %v466
    %475 = vmin.xlane.f32.xlu0 %v474
    %v476 = vpop.xlane.xlu0 %475
    %vm477 = vcmp.eq.f32.partialorder %v474, %v476
    %v478 = vsel %vm477, 1, 0
    %v479 = vcvt.s32.f32 %v478
    %v480 = vadd.f32 %v472, %v479
    %vm481 = vcmp.gt.f32.partialorder %v479, 0.0
    %v482 = vsel %vm481, inf, %v474
    %483 = vmin.xlane.f32.xlu0 %v482
    %v484 = vpop.xlane.xlu0 %483
    %vm485 = vcmp.eq.f32.partialorder %v482, %v484
    %v486 = vsel %vm485, 1, 0
    %v487 = vcvt.s32.f32 %v486
    %v488 = vadd.f32 %v480, %v487
    %489 = vxpose.xlu0.b32.start [1/16] %v376, 128
    %490 = vxpose.xlu0.b32.cont [2/16] 0.0, 128
    %491 = vxpose.xlu0.b32.cont [3/16] 0.0, 128
    %492 = vxpose.xlu0.b32.cont [4/16] 0.0, 128
    %493 = vxpose.xlu0.b32.cont [5/16] 0.0, 128
    %494 = vxpose.xlu0.b32.cont [6/16] 0.0, 128
    %495 = vxpose.xlu0.b32.cont [7/16] 0.0, 128
    %496 = vxpose.xlu0.b32.cont [8/16] 0.0, 128
    %497 = vxpose.xlu0.b32.cont [9/16] 0.0, 128
    %498 = vxpose.xlu0.b32.cont [10/16] 0.0, 128
    %499 = vxpose.xlu0.b32.cont [11/16] 0.0, 128
    %500 = vxpose.xlu0.b32.cont [12/16] 0.0, 128
    %501 = vxpose.xlu0.b32.cont [13/16] 0.0, 128
    %502 = vxpose.xlu0.b32.cont [14/16] 0.0, 128
    %503 = vxpose.xlu0.b32.cont [15/16] 0.0, 128
    %504 = vxpose.xlu0.b32.end [16/16] 0.0, 128
    %v505 = vpop.trf.xlu0
    %v506 = vpop.trf.xlu0
    %v507 = vpop.trf.xlu0
    %v508 = vpop.trf.xlu0
    %v509 = vpop.trf.xlu0
    %v510 = vpop.trf.xlu0
    %v511 = vpop.trf.xlu0
    %v512 = vpop.trf.xlu0
    %v513 = vpop.trf.xlu0
    %v514 = vpop.trf.xlu0
    %v515 = vpop.trf.xlu0
    %v516 = vpop.trf.xlu0
    %v517 = vpop.trf.xlu0
    %v518 = vpop.trf.xlu0
    %v519 = vpop.trf.xlu0
    %v520 = vpop.trf.xlu0
    %vm521 = vcmask 64512
    %v523 = vsel %vm521, %v505, 0
    %v526 = vsel %vm521, %v506, 0
    %v529 = vsel %vm521, %v507, 0
    %v532 = vsel %vm521, %v508, 0
    %v535 = vsel %vm521, %v509, 0
    %v538 = vsel %vm521, %v510, 0
    %v541 = vsel %vm521, %v511, 0
    %v544 = vsel %vm521, %v512, 0
    %v547 = vsel %vm521, %v513, 0
    %v550 = vsel %vm521, %v514, 0
    %v553 = vsel %vm521, %v515, 0
    %v556 = vsel %vm521, %v516, 0
    %v559 = vsel %vm521, %v517, 0
    %v562 = vsel %vm521, %v518, 0
    %v565 = vsel %vm521, %v519, 0
    %v568 = vsel %vm521, %v520, 0
    %570 = vmatprep.subr.mxu0 0.0
    %571 = vmatpush1.msra.mxu0 %v488
    %572 = vmatprep.subr.mxu0 0.0
    %573 = vmatpush1.msra.mxu0 0.0
    %574 = vmatprep.subr.mxu0 0.0
    %575 = vmatpush1.msra.mxu0 0.0
    %576 = vmatprep.subr.mxu0 0.0
    %577 = vmatpush1.msra.mxu0 0.0
    %578 = vmatprep.subr.mxu0 0.0
    %579 = vmatpush1.msra.mxu0 0.0
    %580 = vmatprep.subr.mxu0 0.0
    %581 = vmatpush1.msra.mxu0 0.0
    %582 = vmatprep.subr.mxu0 0.0
    %583 = vmatpush1.msra.mxu0 0.0
    %584 = vmatprep.subr.mxu0 0.0
    %585 = vmatpush1.msra.mxu0 0.0
    %586 = vmatprep.subr.mxu0 0.0
    %587 = vmatpush1.msra.mxu0 0.0
    %588 = vmatprep.subr.mxu0 0.0
    %589 = vmatpush1.msra.mxu0 0.0
    %590 = vmatprep.subr.mxu0 0.0
    %591 = vmatpush1.msra.mxu0 0.0
    %592 = vmatprep.subr.mxu0 0.0
    %593 = vmatpush1.msra.mxu0 0.0
    %594 = vmatprep.subr.mxu0 0.0
    %595 = vmatpush1.msra.mxu0 0.0
    %596 = vmatprep.subr.mxu0 0.0
    %597 = vmatpush1.msra.mxu0 0.0
    %598 = vmatprep.subr.mxu0 0.0
    %599 = vmatpush1.msra.mxu0 0.0
    %600 = vmatprep.subr.mxu0 0.0
    %601 = vmatpush1.msra.mxu0 0.0
    %602 = vmatprep.subr.mxu0 0.0
    %603 = vmatpush1.msra.mxu0 0.0
    %604 = vmatprep.subr.mxu0 0.0
    %605 = vmatpush1.msra.mxu0 0.0
    %606 = vmatprep.subr.mxu0 0.0
    %607 = vmatpush1.msra.mxu0 0.0
    %608 = vmatprep.subr.mxu0 0.0
    %609 = vmatpush1.msra.mxu0 0.0
    %610 = vmatprep.subr.mxu0 0.0
    %611 = vmatpush1.msra.mxu0 0.0
    %612 = vmatprep.subr.mxu0 0.0
    %613 = vmatpush1.msra.mxu0 0.0
    %614 = vmatprep.subr.mxu0 0.0
    %615 = vmatpush1.msra.mxu0 0.0
    %616 = vmatprep.subr.mxu0 0.0
    %617 = vmatpush1.msra.mxu0 0.0
    %618 = vmatprep.subr.mxu0 0.0
    %619 = vmatpush1.msra.mxu0 0.0
    %620 = vmatprep.subr.mxu0 0.0
    %621 = vmatpush1.msra.mxu0 0.0
    %622 = vmatprep.subr.mxu0 0.0
    %623 = vmatpush1.msra.mxu0 0.0
    %624 = vmatprep.subr.mxu0 0.0
    %625 = vmatpush1.msra.mxu0 0.0
    %626 = vmatprep.subr.mxu0 0.0
    %627 = vmatpush1.msra.mxu0 0.0
    %628 = vmatprep.subr.mxu0 0.0
    %629 = vmatpush1.msra.mxu0 0.0
    %630 = vmatprep.subr.mxu0 0.0
    %631 = vmatpush1.msra.mxu0 0.0
    %632 = vmatprep.subr.mxu0 0.0
    %633 = vmatpush1.msra.mxu0 0.0
    %634 = vmatprep.mubr.f32.mxu0 0.0
    %635 = vmatmul.mubr.f32.gmra.mrb[0].mxu0 %v523
    %v636 = vpop.f32.mrb[0].mxu0
    %v637 = vadd.f32 0.0, %v636
    %v638 = vpop.f32.mrb[0].mxu0
    %639 = vmatprep.mubr.f32.mxu0 0.0
    %640 = vmatmul.mubr.f32.gmra.mrb[0].mxu0 %v526
    %v641 = vpop.f32.mrb[0].mxu0
    %v642 = vadd.f32 0.0, %v641
    %v643 = vpop.f32.mrb[0].mxu0
    %644 = vmatprep.mubr.f32.mxu0 0.0
    %645 = vmatmul.mubr.f32.gmra.mrb[0].mxu0 %v529
    %v646 = vpop.f32.mrb[0].mxu0
    %v647 = vadd.f32 0.0, %v646
    %v648 = vpop.f32.mrb[0].mxu0
    %649 = vmatprep.mubr.f32.mxu0 0.0
    %650 = vmatmul.mubr.f32.gmra.mrb[0].mxu0 %v532
    %v651 = vpop.f32.mrb[0].mxu0
    %v652 = vadd.f32 0.0, %v651
    %v653 = vpop.f32.mrb[0].mxu0
    %654 = vmatprep.mubr.f32.mxu0 0.0
    %655 = vmatmul.mubr.f32.gmra.mrb[0].mxu0 %v535
    %v656 = vpop.f32.mrb[0].mxu0
    %v657 = vadd.f32 0.0, %v656
    %v658 = vpop.f32.mrb[0].mxu0
    %659 = vmatprep.mubr.f32.mxu0 0.0
    %660 = vmatmul.mubr.f32.gmra.mrb[0].mxu0 %v538
    %v661 = vpop.f32.mrb[0].mxu0
    %v662 = vadd.f32 0.0, %v661
    %v663 = vpop.f32.mrb[0].mxu0
    %664 = vmatprep.mubr.f32.mxu0 0.0
    %665 = vmatmul.mubr.f32.gmra.mrb[0].mxu0 %v541
    %v666 = vpop.f32.mrb[0].mxu0
    %v667 = vadd.f32 0.0, %v666
    %v668 = vpop.f32.mrb[0].mxu0
    %669 = vmatprep.mubr.f32.mxu0 0.0
    %670 = vmatmul.mubr.f32.gmra.mrb[0].mxu0 %v544
    %v671 = vpop.f32.mrb[0].mxu0
    %v672 = vadd.f32 0.0, %v671
    %v673 = vpop.f32.mrb[0].mxu0
    %674 = vmatprep.mubr.f32.mxu0 0.0
    %675 = vmatmul.mubr.f32.gmra.mrb[0].mxu0 %v547
    %v676 = vpop.f32.mrb[0].mxu0
    %v677 = vadd.f32 0.0, %v676
    %v678 = vpop.f32.mrb[0].mxu0
    %679 = vmatprep.mubr.f32.mxu0 0.0
    %680 = vmatmul.mubr.f32.gmra.mrb[0].mxu0 %v550
    %v681 = vpop.f32.mrb[0].mxu0
    %v682 = vadd.f32 0.0, %v681
    %v683 = vpop.f32.mrb[0].mxu0
    %684 = vmatprep.mubr.f32.mxu0 0.0
    %685 = vmatmul.mubr.f32.gmra.mrb[0].mxu0 %v553
    %v686 = vpop.f32.mrb[0].mxu0
    %v687 = vadd.f32 0.0, %v686
    %v688 = vpop.f32.mrb[0].mxu0
    %689 = vmatprep.mubr.f32.mxu0 0.0
    %690 = vmatmul.mubr.f32.gmra.mrb[0].mxu0 %v556
    %v691 = vpop.f32.mrb[0].mxu0
    %v692 = vadd.f32 0.0, %v691
    %v693 = vpop.f32.mrb[0].mxu0
    %694 = vmatprep.mubr.f32.mxu0 0.0
    %695 = vmatmul.mubr.f32.gmra.mrb[0].mxu0 %v559
    %v696 = vpop.f32.mrb[0].mxu0
    %v697 = vadd.f32 0.0, %v696
    %v698 = vpop.f32.mrb[0].mxu0
    %699 = vmatprep.mubr.f32.mxu0 0.0
    %700 = vmatmul.mubr.f32.gmra.mrb[0].mxu0 %v562
    %v701 = vpop.f32.mrb[0].mxu0
    %v702 = vadd.f32 0.0, %v701
    %v703 = vpop.f32.mrb[0].mxu0
    %704 = vmatprep.mubr.f32.mxu0 0.0
    %705 = vmatmul.mubr.f32.gmra.mrb[0].mxu0 %v565
    %v706 = vpop.f32.mrb[0].mxu0
    %v707 = vadd.f32 0.0, %v706
    %v708 = vpop.f32.mrb[0].mxu0
    %709 = vmatprep.mubr.f32.mxu0 0.0
    %710 = vmatmul.mubr.f32.gmra.mrb[0].mxu0 %v568
    %v711 = vpop.f32.mrb[0].mxu0
    %v712 = vadd.f32 0.0, %v711
    %v713 = vpop.f32.mrb[0].mxu0
    %714 = vdwg.mxu0
    %v715 = vlaneseq
    %v716 = vshrl.u32 %v715, 7
    %v717 = vadd.s32 %v716, 8
    %v718 = vadd.s32 %v716, 16
    %v719 = vadd.s32 %v716, 24
    %v720 = vadd.s32 %v716, 32
    %v721 = vadd.s32 %v716, 40
    %v722 = vadd.s32 %v716, 48
    %v723 = vadd.s32 %v716, 56
    %v724 = vadd.s32 %v716, 64
    %v725 = vadd.s32 %v716, 72
    %v726 = vadd.s32 %v716, 80
    %v727 = vadd.s32 %v716, 88
    %v728 = vadd.s32 %v716, 96
    %v729 = vadd.s32 %v716, 104
    %v730 = vadd.s32 %v716, 112
    %v731 = vadd.s32 %v716, 120
    %vm732 = vcmp.eq.s32.totalorder %v716, %v89
    %vm733 = vcmp.eq.s32.totalorder %v717, %v89
    %vm734 = vcmp.eq.s32.totalorder %v718, %v89
    %vm735 = vcmp.eq.s32.totalorder %v719, %v89
    %vm736 = vcmp.eq.s32.totalorder %v720, %v89
    %vm737 = vcmp.eq.s32.totalorder %v721, %v89
    %vm738 = vcmp.eq.s32.totalorder %v722, %v89
    %vm739 = vcmp.eq.s32.totalorder %v723, %v89
    %vm740 = vcmp.eq.s32.totalorder %v724, %v89
    %vm741 = vcmp.eq.s32.totalorder %v725, %v89
    %vm742 = vcmp.eq.s32.totalorder %v726, %v89
    %vm743 = vcmp.eq.s32.totalorder %v727, %v89
    %vm744 = vcmp.eq.s32.totalorder %v728, %v89
    %vm745 = vcmp.eq.s32.totalorder %v729, %v89
    %vm746 = vcmp.eq.s32.totalorder %v730, %v89
    %vm747 = vcmp.eq.s32.totalorder %v731, %v89
    %v748 = vsel %vm732, 1, 0
    %v749 = vsel %vm733, 1, 0
    %v750 = vsel %vm734, 1, 0
    %v751 = vsel %vm735, 1, 0
    %v752 = vsel %vm736, 1, 0
    %v753 = vsel %vm737, 1, 0
    %v754 = vsel %vm738, 1, 0
    %v755 = vsel %vm739, 1, 0
    %v756 = vsel %vm740, 1, 0
    %v757 = vsel %vm741, 1, 0
    %v758 = vsel %vm742, 1, 0
    %v759 = vsel %vm743, 1, 0
    %v760 = vsel %vm744, 1, 0
    %v761 = vsel %vm745, 1, 0
    %v762 = vsel %vm746, 1, 0
    %v763 = vsel %vm747, 1, 0
    %v764 = vcvt.s32.f32 %v748
    %v765 = vcvt.s32.f32 %v749
    %v766 = vcvt.s32.f32 %v750
    %v767 = vcvt.s32.f32 %v751
    %v768 = vcvt.s32.f32 %v752
    %v769 = vcvt.s32.f32 %v753
    %v770 = vcvt.s32.f32 %v754
    %v771 = vcvt.s32.f32 %v755
    %v772 = vcvt.s32.f32 %v756
    %v773 = vcvt.s32.f32 %v757
    %v774 = vcvt.s32.f32 %v758
    %v775 = vcvt.s32.f32 %v759
    %v776 = vcvt.s32.f32 %v760
    %v777 = vcvt.s32.f32 %v761
    %v778 = vcvt.s32.f32 %v762
    %v779 = vcvt.s32.f32 %v763
    %v780 = vmul.f32 %v637, %v764
    %v781 = vmul.f32 %v642, %v765
    %v782 = vmul.f32 %v647, %v766
    %v783 = vmul.f32 %v652, %v767
    %v784 = vmul.f32 %v657, %v768
    %v785 = vmul.f32 %v662, %v769
    %v786 = vmul.f32 %v667, %v770
    %v787 = vmul.f32 %v672, %v771
    %v788 = vmul.f32 %v677, %v772
    %v789 = vmul.f32 %v682, %v773
    %v790 = vmul.f32 %v687, %v774
    %v791 = vmul.f32 %v692, %v775
    %v792 = vmul.f32 %v697, %v776
    %v793 = vmul.f32 %v702, %v777
    %v794 = vmul.f32 %v707, %v778
    %v795 = vmul.f32 %v712, %v779
    %796 = vadd.xlane.f32.xlu0 %v780
    %v797 = vpop.xlane.xlu0 %796
    %798 = vadd.xlane.f32.xlu0 %v781
    %v799 = vpop.xlane.xlu0 %798
    %800 = vadd.xlane.f32.xlu0 %v782
    %v801 = vpop.xlane.xlu0 %800
    %802 = vadd.xlane.f32.xlu0 %v783
    %v803 = vpop.xlane.xlu0 %802
    %804 = vadd.xlane.f32.xlu0 %v784
    %v805 = vpop.xlane.xlu0 %804
    %806 = vadd.xlane.f32.xlu0 %v785
    %v807 = vpop.xlane.xlu0 %806
    %808 = vadd.xlane.f32.xlu0 %v786
    %v809 = vpop.xlane.xlu0 %808
    %810 = vadd.xlane.f32.xlu0 %v787
    %v811 = vpop.xlane.xlu0 %810
    %812 = vadd.xlane.f32.xlu0 %v788
    %v813 = vpop.xlane.xlu0 %812
    %814 = vadd.xlane.f32.xlu0 %v789
    %v815 = vpop.xlane.xlu0 %814
    %816 = vadd.xlane.f32.xlu0 %v790
    %v817 = vpop.xlane.xlu0 %816
    %818 = vadd.xlane.f32.xlu0 %v791
    %v819 = vpop.xlane.xlu0 %818
    %820 = vadd.xlane.f32.xlu0 %v792
    %v821 = vpop.xlane.xlu0 %820
    %822 = vadd.xlane.f32.xlu0 %v793
    %v823 = vpop.xlane.xlu0 %822
    %824 = vadd.xlane.f32.xlu0 %v794
    %v825 = vpop.xlane.xlu0 %824
    %826 = vadd.xlane.f32.xlu0 %v795
    %v827 = vpop.xlane.xlu0 %826
    %vm828 = vcmp.gt.f32.partialorder %v637, 0.0
    %vm829 = vcmp.gt.f32.partialorder %v642, 0.0
    %vm830 = vcmp.gt.f32.partialorder %v647, 0.0
    %vm831 = vcmp.gt.f32.partialorder %v652, 0.0
    %vm832 = vcmp.gt.f32.partialorder %v657, 0.0
    %vm833 = vcmp.gt.f32.partialorder %v662, 0.0
    %vm834 = vcmp.gt.f32.partialorder %v667, 0.0
    %vm835 = vcmp.gt.f32.partialorder %v672, 0.0
    %vm836 = vcmp.gt.f32.partialorder %v677, 0.0
    %vm837 = vcmp.gt.f32.partialorder %v682, 0.0
    %vm838 = vcmp.gt.f32.partialorder %v687, 0.0
    %vm839 = vcmp.gt.f32.partialorder %v692, 0.0
    %vm840 = vcmp.gt.f32.partialorder %v697, 0.0
    %vm841 = vcmp.gt.f32.partialorder %v702, 0.0
    %vm842 = vcmp.gt.f32.partialorder %v707, 0.0
    %vm843 = vcmp.gt.f32.partialorder %v712, 0.0
    %v844 = vsel %vm828, 1, 0
    %v845 = vsel %vm829, 1, 0
    %v846 = vsel %vm830, 1, 0
    %v847 = vsel %vm831, 1, 0
    %v848 = vsel %vm832, 1, 0
    %v849 = vsel %vm833, 1, 0
    %v850 = vsel %vm834, 1, 0
    %v851 = vsel %vm835, 1, 0
    %v852 = vsel %vm836, 1, 0
    %v853 = vsel %vm837, 1, 0
    %v854 = vsel %vm838, 1, 0
    %v855 = vsel %vm839, 1, 0
    %v856 = vsel %vm840, 1, 0
    %v857 = vsel %vm841, 1, 0
    %v858 = vsel %vm842, 1, 0
    %v859 = vsel %vm843, 1, 0
    %v860 = vcvt.s32.f32 %v844
    %v861 = vcvt.s32.f32 %v845
    %v862 = vcvt.s32.f32 %v846
    %v863 = vcvt.s32.f32 %v847
    %v864 = vcvt.s32.f32 %v848
    %v865 = vcvt.s32.f32 %v849
    %v866 = vcvt.s32.f32 %v850
    %v867 = vcvt.s32.f32 %v851
    %v868 = vcvt.s32.f32 %v852
    %v869 = vcvt.s32.f32 %v853
    %v870 = vcvt.s32.f32 %v854
    %v871 = vcvt.s32.f32 %v855
    %v872 = vcvt.s32.f32 %v856
    %v873 = vcvt.s32.f32 %v857
    %v874 = vcvt.s32.f32 %v858
    %v875 = vcvt.s32.f32 %v859
    %v876 = vsub.f32 %v797, %v637
    %v877 = vsub.f32 %v799, %v642
    %v878 = vsub.f32 %v801, %v647
    %v879 = vsub.f32 %v803, %v652
    %v880 = vsub.f32 %v805, %v657
    %v881 = vsub.f32 %v807, %v662
    %v882 = vsub.f32 %v809, %v667
    %v883 = vsub.f32 %v811, %v672
    %v884 = vsub.f32 %v813, %v677
    %v885 = vsub.f32 %v815, %v682
    %v886 = vsub.f32 %v817, %v687
    %v887 = vsub.f32 %v819, %v692
    %v888 = vsub.f32 %v821, %v697
    %v889 = vsub.f32 %v823, %v702
    %v890 = vsub.f32 %v825, %v707
    %v891 = vsub.f32 %v827, %v712
    %v892 = vmax.f32 %v876, 0.0
    %v893 = vmax.f32 %v877, 0.0
    %v894 = vmax.f32 %v878, 0.0
    %v895 = vmax.f32 %v879, 0.0
    %v896 = vmax.f32 %v880, 0.0
    %v897 = vmax.f32 %v881, 0.0
    %v898 = vmax.f32 %v882, 0.0
    %v899 = vmax.f32 %v883, 0.0
    %v900 = vmax.f32 %v884, 0.0
    %v901 = vmax.f32 %v885, 0.0
    %v902 = vmax.f32 %v886, 0.0
    %v903 = vmax.f32 %v887, 0.0
    %v904 = vmax.f32 %v888, 0.0
    %v905 = vmax.f32 %v889, 0.0
    %v906 = vmax.f32 %v890, 0.0
    %v907 = vmax.f32 %v891, 0.0
    %v908 = vmax.f32 %v56, %v860
    %v909 = vmax.f32 %v57, %v861
    %v910 = vmax.f32 %v58, %v862
    %v911 = vmax.f32 %v59, %v863
    %v912 = vmax.f32 %v60, %v864
    %v913 = vmax.f32 %v61, %v865
    %v914 = vmax.f32 %v62, %v866
    %v915 = vmax.f32 %v63, %v867
    %v916 = vmax.f32 %v64, %v868
    %v917 = vmax.f32 %v65, %v869
    %v918 = vmax.f32 %v66, %v870
    %v919 = vmax.f32 %v67, %v871
    %v920 = vmax.f32 %v68, %v872
    %v921 = vmax.f32 %v69, %v873
    %v922 = vmax.f32 %v70, %v874
    %v923 = vmax.f32 %v71, %v875
    %v924 = vmul.f32 %v892, -0.105360515
    %v925 = vmul.f32 %v893, -0.105360515
    %v926 = vmul.f32 %v894, -0.105360515
    %v927 = vmul.f32 %v895, -0.105360515
    %v928 = vmul.f32 %v896, -0.105360515
    %v929 = vmul.f32 %v897, -0.105360515
    %v930 = vmul.f32 %v898, -0.105360515
    %v931 = vmul.f32 %v899, -0.105360515
    %v932 = vmul.f32 %v900, -0.105360515
    %v933 = vmul.f32 %v901, -0.105360515
    %v934 = vmul.f32 %v902, -0.105360515
    %v935 = vmul.f32 %v903, -0.105360515
    %v936 = vmul.f32 %v904, -0.105360515
    %v937 = vmul.f32 %v905, -0.105360515
    %v938 = vmul.f32 %v906, -0.105360515
    %v939 = vmul.f32 %v907, -0.105360515
    %v940 = vmul.f32 %v924, 1.442695
    %v941 = vpow.pop %v940
    %v942 = vmul.f32 %v925, 1.442695
    %v943 = vpow.pop %v942
    %v944 = vmul.f32 %v926, 1.442695
    %v945 = vpow.pop %v944
    %v946 = vmul.f32 %v927, 1.442695
    %v947 = vpow.pop %v946
    %v948 = vmul.f32 %v928, 1.442695
    %v949 = vpow.pop %v948
    %v950 = vmul.f32 %v929, 1.442695
    %v951 = vpow.pop %v950
    %v952 = vmul.f32 %v930, 1.442695
    %v953 = vpow.pop %v952
    %v954 = vmul.f32 %v931, 1.442695
    %v955 = vpow.pop %v954
    %v956 = vmul.f32 %v932, 1.442695
    %v957 = vpow.pop %v956
    %v958 = vmul.f32 %v933, 1.442695
    %v959 = vpow.pop %v958
    %v960 = vmul.f32 %v934, 1.442695
    %v961 = vpow.pop %v960
    %v962 = vmul.f32 %v935, 1.442695
    %v963 = vpow.pop %v962
    %v964 = vmul.f32 %v936, 1.442695
    %v965 = vpow.pop %v964
    %v966 = vmul.f32 %v937, 1.442695
    %v967 = vpow.pop %v966
    %v968 = vmul.f32 %v938, 1.442695
    %v969 = vpow.pop %v968
    %v970 = vmul.f32 %v939, 1.442695
    %v971 = vpow.pop %v970
    %v972 = vmul.f32 %v908, %v941
    %v973 = vmul.f32 %v909, %v943
    %v974 = vmul.f32 %v910, %v945
    %v975 = vmul.f32 %v911, %v947
    %v976 = vmul.f32 %v912, %v949
    %v977 = vmul.f32 %v913, %v951
    %v978 = vmul.f32 %v914, %v953
    %v979 = vmul.f32 %v915, %v955
    %v980 = vmul.f32 %v916, %v957
    %v981 = vmul.f32 %v917, %v959
    %v982 = vmul.f32 %v918, %v961
    %v983 = vmul.f32 %v919, %v963
    %v984 = vmul.f32 %v920, %v965
    %v985 = vmul.f32 %v921, %v967
    %v986 = vmul.f32 %v922, %v969
    %v987 = vmul.f32 %v923, %v971
    %vm988 = vcmp.ge.f32.partialorder %v972, 0.34867844
    %vm989 = vcmp.ge.f32.partialorder %v973, 0.34867844
    %vm990 = vcmp.ge.f32.partialorder %v974, 0.34867844
    %vm991 = vcmp.ge.f32.partialorder %v975, 0.34867844
    %vm992 = vcmp.ge.f32.partialorder %v976, 0.34867844
    %vm993 = vcmp.ge.f32.partialorder %v977, 0.34867844
    %vm994 = vcmp.ge.f32.partialorder %v978, 0.34867844
    %vm995 = vcmp.ge.f32.partialorder %v979, 0.34867844
    %vm996 = vcmp.ge.f32.partialorder %v980, 0.34867844
    %vm997 = vcmp.ge.f32.partialorder %v981, 0.34867844
    %vm998 = vcmp.ge.f32.partialorder %v982, 0.34867844
    %vm999 = vcmp.ge.f32.partialorder %v983, 0.34867844
    %vm1000 = vcmp.ge.f32.partialorder %v984, 0.34867844
    %vm1001 = vcmp.ge.f32.partialorder %v985, 0.34867844
    %vm1002 = vcmp.ge.f32.partialorder %v986, 0.34867844
    %vm1003 = vcmp.ge.f32.partialorder %v987, 0.34867844
    %v1004 = vsel %vm988, 1, 0
    %v1005 = vsel %vm989, 1, 0
    %v1006 = vsel %vm990, 1, 0
    %v1007 = vsel %vm991, 1, 0
    %v1008 = vsel %vm992, 1, 0
    %v1009 = vsel %vm993, 1, 0
    %v1010 = vsel %vm994, 1, 0
    %v1011 = vsel %vm995, 1, 0
    %v1012 = vsel %vm996, 1, 0
    %v1013 = vsel %vm997, 1, 0
    %v1014 = vsel %vm998, 1, 0
    %v1015 = vsel %vm999, 1, 0
    %v1016 = vsel %vm1000, 1, 0
    %v1017 = vsel %vm1001, 1, 0
    %v1018 = vsel %vm1002, 1, 0
    %v1019 = vsel %vm1003, 1, 0
    %v1020 = vcvt.s32.f32 %v1004
    %v1021 = vcvt.s32.f32 %v1005
    %v1022 = vcvt.s32.f32 %v1006
    %v1023 = vcvt.s32.f32 %v1007
    %v1024 = vcvt.s32.f32 %v1008
    %v1025 = vcvt.s32.f32 %v1009
    %v1026 = vcvt.s32.f32 %v1010
    %v1027 = vcvt.s32.f32 %v1011
    %v1028 = vcvt.s32.f32 %v1012
    %v1029 = vcvt.s32.f32 %v1013
    %v1030 = vcvt.s32.f32 %v1014
    %v1031 = vcvt.s32.f32 %v1015
    %v1032 = vcvt.s32.f32 %v1016
    %v1033 = vcvt.s32.f32 %v1017
    %v1034 = vcvt.s32.f32 %v1018
    %v1035 = vcvt.s32.f32 %v1019
    %v1036 = vmul.f32 %v972, %v1020
    %v1037 = vmul.f32 %v973, %v1021
    %v1038 = vmul.f32 %v974, %v1022
    %v1039 = vmul.f32 %v975, %v1023
    %v1040 = vmul.f32 %v976, %v1024
    %v1041 = vmul.f32 %v977, %v1025
    %v1042 = vmul.f32 %v978, %v1026
    %v1043 = vmul.f32 %v979, %v1027
    %v1044 = vmul.f32 %v980, %v1028
    %v1045 = vmul.f32 %v981, %v1029
    %v1046 = vmul.f32 %v982, %v1030
    %v1047 = vmul.f32 %v983, %v1031
    %v1048 = vmul.f32 %v984, %v1032
    %v1049 = vmul.f32 %v985, %v1033
    %v1050 = vmul.f32 %v986, %v1034
    %v1051 = vmul.f32 %v987, %v1035
    %1052 = vmatprep.subr.mxu0 0.0
    %1053 = vmatpush1.msra.mxu0 %v1036
    %1054 = vmatprep.subr.mxu0 0.0
    %1055 = vmatpush1.msra.mxu0 %v1037
    %1056 = vmatprep.subr.mxu0 0.0
    %1057 = vmatpush1.msra.mxu0 %v1038
    %1058 = vmatprep.subr.mxu0 0.0
    %1059 = vmatpush1.msra.mxu0 %v1039
    %1060 = vmatprep.subr.mxu0 0.0
    %1061 = vmatpush1.msra.mxu0 %v1040
    %1062 = vmatprep.subr.mxu0 0.0
    %1063 = vmatpush1.msra.mxu0 %v1041
    %1064 = vmatprep.subr.mxu0 0.0
    %1065 = vmatpush1.msra.mxu0 %v1042
    %1066 = vmatprep.subr.mxu0 0.0
    %1067 = vmatpush1.msra.mxu0 %v1043
    %1068 = vmatprep.subr.mxu0 0.0
    %1069 = vmatpush1.msra.mxu0 %v1044
    %1070 = vmatprep.subr.mxu0 0.0
    %1071 = vmatpush1.msra.mxu0 %v1045
    %1072 = vmatprep.subr.mxu0 0.0
    %1073 = vmatpush1.msra.mxu0 %v1046
    %1074 = vmatprep.subr.mxu0 0.0
    %1075 = vmatpush1.msra.mxu0 %v1047
    %1076 = vmatprep.subr.mxu0 0.0
    %1077 = vmatpush1.msra.mxu0 %v1048
    %1078 = vmatprep.subr.mxu0 0.0
    %1079 = vmatpush1.msra.mxu0 %v1049
    %1080 = vmatprep.subr.mxu0 0.0
    %1081 = vmatpush1.msra.mxu0 %v1050
    %1082 = vmatprep.subr.mxu0 0.0
    %1083 = vmatpush1.msra.mxu0 %v1051
    %1084 = vmatprep.subr.mxu0 0.0
    %1085 = vmatpush1.msra.mxu0 0.0
    %1086 = vmatprep.subr.mxu0 0.0
    %1087 = vmatpush1.msra.mxu0 0.0
    %1088 = vmatprep.subr.mxu0 0.0
    %1089 = vmatpush1.msra.mxu0 0.0
    %1090 = vmatprep.subr.mxu0 0.0
    %1091 = vmatpush1.msra.mxu0 0.0
    %1092 = vmatprep.subr.mxu0 0.0
    %1093 = vmatpush1.msra.mxu0 0.0
    %1094 = vmatprep.subr.mxu0 0.0
    %1095 = vmatpush1.msra.mxu0 0.0
    %1096 = vmatprep.subr.mxu0 0.0
    %1097 = vmatpush1.msra.mxu0 0.0
    %1098 = vmatprep.subr.mxu0 0.0
    %1099 = vmatpush1.msra.mxu0 0.0
    %1100 = vmatprep.subr.mxu0 0.0
    %1101 = vmatpush1.msra.mxu0 0.0
    %1102 = vmatprep.subr.mxu0 0.0
    %1103 = vmatpush1.msra.mxu0 0.0
    %1104 = vmatprep.subr.mxu0 0.0
    %1105 = vmatpush1.msra.mxu0 0.0
    %1106 = vmatprep.subr.mxu0 0.0
    %1107 = vmatpush1.msra.mxu0 0.0
    %1108 = vmatprep.subr.mxu0 0.0
    %1109 = vmatpush1.msra.mxu0 0.0
    %1110 = vmatprep.subr.mxu0 0.0
    %1111 = vmatpush1.msra.mxu0 0.0
    %1112 = vmatprep.subr.mxu0 0.0
    %1113 = vmatpush1.msra.mxu0 0.0
    %1114 = vmatprep.subr.mxu0 0.0
    %1115 = vmatpush1.msra.mxu0 0.0
    %1116 = vmatprep.mubr.f32.mxu0 0.0
    %1117 = vmatmul.mubr.f32.gmra.mrb[0].mxu0 %v96
    %v1118 = vpop.f32.mrb[0].mxu0
    %v1119 = vadd.f32 0.0, %v1118
    %v1120 = vpop.f32.mrb[0].mxu0
    %1121 = vdwg.mxu0
    %1122 = vmatprep.subr.mxu0 0.0
    %1123 = vmatpush1.msra.mxu0 %v72
    %1124 = vmatprep.subr.mxu0 0.0
    %1125 = vmatpush1.msra.mxu0 %v73
    %1126 = vmatprep.subr.mxu0 0.0
    %1127 = vmatpush1.msra.mxu0 %v74
    %1128 = vmatprep.subr.mxu0 0.0
    %1129 = vmatpush1.msra.mxu0 %v75
    %1130 = vmatprep.subr.mxu0 0.0
    %1131 = vmatpush1.msra.mxu0 %v76
    %1132 = vmatprep.subr.mxu0 0.0
    %1133 = vmatpush1.msra.mxu0 %v77
    %1134 = vmatprep.subr.mxu0 0.0
    %1135 = vmatpush1.msra.mxu0 %v78
    %1136 = vmatprep.subr.mxu0 0.0
    %1137 = vmatpush1.msra.mxu0 %v79
    %1138 = vmatprep.subr.mxu0 0.0
    %1139 = vmatpush1.msra.mxu0 %v80
    %1140 = vmatprep.subr.mxu0 0.0
    %1141 = vmatpush1.msra.mxu0 %v81
    %1142 = vmatprep.subr.mxu0 0.0
    %1143 = vmatpush1.msra.mxu0 %v82
    %1144 = vmatprep.subr.mxu0 0.0
    %1145 = vmatpush1.msra.mxu0 %v83
    %1146 = vmatprep.subr.mxu0 0.0
    %1147 = vmatpush1.msra.mxu0 %v84
    %1148 = vmatprep.subr.mxu0 0.0
    %1149 = vmatpush1.msra.mxu0 %v85
    %1150 = vmatprep.subr.mxu0 0.0
    %1151 = vmatpush1.msra.mxu0 %v86
    %1152 = vmatprep.subr.mxu0 0.0
    %1153 = vmatpush1.msra.mxu0 %v87
    %1154 = vmatprep.subr.mxu0 0.0
    %1155 = vmatpush1.msra.mxu0 0.0
    %1156 = vmatprep.subr.mxu0 0.0
    %1157 = vmatpush1.msra.mxu0 0.0
    %1158 = vmatprep.subr.mxu0 0.0
    %1159 = vmatpush1.msra.mxu0 0.0
    %1160 = vmatprep.subr.mxu0 0.0
    %1161 = vmatpush1.msra.mxu0 0.0
    %1162 = vmatprep.subr.mxu0 0.0
    %1163 = vmatpush1.msra.mxu0 0.0
    %1164 = vmatprep.subr.mxu0 0.0
    %1165 = vmatpush1.msra.mxu0 0.0
    %1166 = vmatprep.subr.mxu0 0.0
    %1167 = vmatpush1.msra.mxu0 0.0
    %1168 = vmatprep.subr.mxu0 0.0
    %1169 = vmatpush1.msra.mxu0 0.0
    %1170 = vmatprep.subr.mxu0 0.0
    %1171 = vmatpush1.msra.mxu0 0.0
    %1172 = vmatprep.subr.mxu0 0.0
    %1173 = vmatpush1.msra.mxu0 0.0
    %1174 = vmatprep.subr.mxu0 0.0
    %1175 = vmatpush1.msra.mxu0 0.0
    %1176 = vmatprep.subr.mxu0 0.0
    %1177 = vmatpush1.msra.mxu0 0.0
    %1178 = vmatprep.subr.mxu0 0.0
    %1179 = vmatpush1.msra.mxu0 0.0
    %1180 = vmatprep.subr.mxu0 0.0
    %1181 = vmatpush1.msra.mxu0 0.0
    %1182 = vmatprep.subr.mxu0 0.0
    %1183 = vmatpush1.msra.mxu0 0.0
    %1184 = vmatprep.subr.mxu0 0.0
    %1185 = vmatpush1.msra.mxu0 0.0
    %1186 = vmatprep.mubr.f32.mxu0 0.0
    %1187 = vmatmul.mubr.f32.gmra.mrb[0].mxu0 %v96
    %v1188 = vpop.f32.mrb[0].mxu0
    %v1189 = vadd.f32 0.0, %v1188
    %v1190 = vpop.f32.mrb[0].mxu0
    %1191 = vdwg.mxu0
    %vm1192 = vcmp.gt.f32.partialorder %v1119, 0.0
    %vm1193 = vcmp.lt.f32.partialorder %v1189, 1.0
    %vm1194 = vmand %vm1192, %vm1193
    %v1195 = vsel %vm1194, 1, 0
    %v1196 = vcvt.s32.f32 %v1195
    %v1197 = vmul.f32 %v96, %v367
    %1198 = vadd.xlane.f32.xlu0 %v1197
    %v1199 = vpop.xlane.xlu0 %1198
    %v1200 = vmul.f32 %v367, %v1196
    %v1201 = vmul.f32 %v1200, -0.001
    %v1202 = vmul.f32 %v1201, 1.442695
    %v1203 = vpow.pop %v1202
    %vm1204 = vcmp.gt.f32.partialorder %v1200, 0.0
    %v1205 = vsel %vm1204, 1, 0
    %v1206 = vcvt.s32.f32 %v1205
    %v1207 = vmul.f32 %v1203, %v1206
    %1208 = vadd.xlane.f32.xlu0 %v1207
    %v1209 = vpop.xlane.xlu0 %1208
    %vm1210 = vcmp.gt.f32.partialorder %v1209, 0.0
    %v1211 = vsel %vm1210, %v1209, 1.0
    %v1212 = vrcp.pop %v1211
    %v1213 = vmul.f32 %v1207, %v1212
    %v1214 = vmul.f32 %v1213, %v1200
    %1215 = vadd.xlane.f32.xlu0 %v1214
    %v1216 = vpop.xlane.xlu0 %1215
    %v1217 = vsub.f32 %v1199, %v1216
    %v1218 = vmax.f32 %v1217, 0.0
    %vm1219 = vcmask 7168
    %v1220 = vsel %vm1219, %v1218, 0.0
    %1221 = vadd.xlane.f32.xlu0 %v1220
    %v1222 = vpop.xlane.xlu0 %1221
    %v1223 = vrot.slane %v1222, 4
    %v1224 = vadd.f32 %v1222, %v1223
    %v1225 = vrot.slane %v1224, 2
    %v1226 = vadd.f32 %v1224, %v1225
    %v1227 = vrot.slane %v1226, 1
    %v1228 = vadd.f32 %v1226, %v1227
    %s1229 = vtos %v1228
    %s1230 = smul.f32 %s1229, 0.125
    %s1231 = scalar_lea.smem [#allocation6], 0
    %1232 = sst [smem:[%s1231]] %s1230
    %1233 = vxpose.xlu0.b32.start [1/16] %v1036, 128
    %1234 = vxpose.xlu0.b32.cont [2/16] %v1037, 128
    %1235 = vxpose.xlu0.b32.cont [3/16] %v1038, 128
    %1236 = vxpose.xlu0.b32.cont [4/16] %v1039, 128
    %1237 = vxpose.xlu0.b32.cont [5/16] %v1040, 128
    %1238 = vxpose.xlu0.b32.cont [6/16] %v1041, 128
    %1239 = vxpose.xlu0.b32.cont [7/16] %v1042, 128
    %1240 = vxpose.xlu0.b32.cont [8/16] %v1043, 128
    %1241 = vxpose.xlu0.b32.cont [9/16] %v1044, 128
    %1242 = vxpose.xlu0.b32.cont [10/16] %v1045, 128
    %1243 = vxpose.xlu0.b32.cont [11/16] %v1046, 128
    %1244 = vxpose.xlu0.b32.cont [12/16] %v1047, 128
    %1245 = vxpose.xlu0.b32.cont [13/16] %v1048, 128
    %1246 = vxpose.xlu0.b32.cont [14/16] %v1049, 128
    %1247 = vxpose.xlu0.b32.cont [15/16] %v1050, 128
    %1248 = vxpose.xlu0.b32.end [16/16] %v1051, 128
    %v1249 = vpop.trf.xlu0
    %v1250 = vpop.trf.xlu0
    %v1251 = vpop.trf.xlu0
    %v1252 = vpop.trf.xlu0
    %v1253 = vpop.trf.xlu0
    %v1254 = vpop.trf.xlu0
    %v1255 = vpop.trf.xlu0
    %v1256 = vpop.trf.xlu0
    %v1257 = vpop.trf.xlu0
    %v1258 = vpop.trf.xlu0
    %v1259 = vpop.trf.xlu0
    %v1260 = vpop.trf.xlu0
    %v1261 = vpop.trf.xlu0
    %v1262 = vpop.trf.xlu0
    %v1263 = vpop.trf.xlu0
    %v1264 = vpop.trf.xlu0
    %v1265 = vadd.f32 %v1036, %v1249
    %v1266 = vadd.f32 %v1037, %v1250
    %v1267 = vadd.f32 %v1038, %v1251
    %v1268 = vadd.f32 %v1039, %v1252
    %v1269 = vadd.f32 %v1040, %v1253
    %v1270 = vadd.f32 %v1041, %v1254
    %v1271 = vadd.f32 %v1042, %v1255
    %v1272 = vadd.f32 %v1043, %v1256
    %v1273 = vadd.f32 %v1044, %v1257
    %v1274 = vadd.f32 %v1045, %v1258
    %v1275 = vadd.f32 %v1046, %v1259
    %v1276 = vadd.f32 %v1047, %v1260
    %v1277 = vadd.f32 %v1048, %v1261
    %v1278 = vadd.f32 %v1049, %v1262
    %v1279 = vadd.f32 %v1050, %v1263
    %v1280 = vadd.f32 %v1051, %v1264
    %v1281 = vmul.f32 %v1265, 0.5
    %v1282 = vmul.f32 %v1266, 0.5
    %v1283 = vmul.f32 %v1267, 0.5
    %v1284 = vmul.f32 %v1268, 0.5
    %v1285 = vmul.f32 %v1269, 0.5
    %v1286 = vmul.f32 %v1270, 0.5
    %v1287 = vmul.f32 %v1271, 0.5
    %v1288 = vmul.f32 %v1272, 0.5
    %v1289 = vmul.f32 %v1273, 0.5
    %v1290 = vmul.f32 %v1274, 0.5
    %v1291 = vmul.f32 %v1275, 0.5
    %v1292 = vmul.f32 %v1276, 0.5
    %v1293 = vmul.f32 %v1277, 0.5
    %v1294 = vmul.f32 %v1278, 0.5
    %v1295 = vmul.f32 %v1279, 0.5
    %v1296 = vmul.f32 %v1280, 0.5
    %1297 = vst [vmem:[#allocation7] sm:$0xff] %v1281
    %1298 = vst [vmem:[#allocation7 + $0x8] sm:$0xff] %v1282
    %1299 = vst [vmem:[#allocation7 + $0x10] sm:$0xff] %v1283
    %1300 = vst [vmem:[#allocation7 + $0x18] sm:$0xff] %v1284
    %1301 = vst [vmem:[#allocation7 + $0x20] sm:$0xff] %v1285
    %1302 = vst [vmem:[#allocation7 + $0x28] sm:$0xff] %v1286
    %1303 = vst [vmem:[#allocation7 + $0x30] sm:$0xff] %v1287
    %1304 = vst [vmem:[#allocation7 + $0x38] sm:$0xff] %v1288
    %1305 = vst [vmem:[#allocation7 + $0x40] sm:$0xff] %v1289
    %1306 = vst [vmem:[#allocation7 + $0x48] sm:$0xff] %v1290
    %1307 = vst [vmem:[#allocation7 + $0x50] sm:$0xff] %v1291
    %1308 = vst [vmem:[#allocation7 + $0x58] sm:$0xff] %v1292
    %1309 = vst [vmem:[#allocation7 + $0x60] sm:$0xff] %v1293
    %1310 = vst [vmem:[#allocation7 + $0x68] sm:$0xff] %v1294
    %1311 = vst [vmem:[#allocation7 + $0x70] sm:$0xff] %v1295
    %1312 = vst [vmem:[#allocation7 + $0x78] sm:$0xff] %v1296
    // Predicated region
    $region26: #{navq_forward.1} parent=1 // pred_check
      _
    $region27: #{navq_forward.1} parent=1 // pred_check_branch
      %1314 = sbr.rel (0) target = $region29
    $region28: #{navq_forward.1} parent=1 // pred_region
      %s1316 = ssub.s32 16, 16
      %1317 = vsyncadd [#allocation5], %s1316
      %1320 = dma.smem_to_hbm [#allocation6], 16, %s5, [#allocation5]
    $region29: #{navq_forward.1} parent=1 // pred_fallthru
      _
    // Predicated region
    $region30: #{navq_forward.1} parent=1 // pred_check
      _
    $region31: #{navq_forward.1} parent=1 // pred_check_branch
      %1322 = sbr.rel (0) target = $region33
    $region32: #{navq_forward.1} parent=1 // pred_region
      %s1324 = ssub.s32 2048, 2048
      %1325 = vsyncadd [#allocation4], %s1324
      %s1326 = sshll.u32 [#allocation7], 4
      %s1327 = int_to_ptr.vmem [resolvable:$true] %s1326
      %1332 = dma.vmem_to_hbm [thread:$0]  %s1327, 2048, %s6, [#allocation4], 128, 128, 8
    $region33: #{navq_forward.1} parent=1 // pred_fallthru
      _
    // Predicated region
    $region34: #{navq_forward.1} parent=1 // pred_check
      _
    $region35: #{navq_forward.1} parent=1 // pred_check_branch
      %1334 = sbr.rel (0) target = $region37
    $region36: #{navq_forward.1} parent=1 // pred_region
      %1335 = dma.done [#allocation5], 16
    $region37: #{navq_forward.1} parent=1 // pred_fallthru
      _
    // Predicated region
    $region38: #{navq_forward.1} parent=1 // pred_check
      _
    $region39: #{navq_forward.1} parent=1 // pred_check_branch
      %1337 = sbr.rel (0) target = $region41
    $region40: #{navq_forward.1} parent=1 // pred_region
      %1338 = dma.done [#allocation4], 2048
    $region41: #{navq_forward.1} parent=1 // pred_fallthru
      _
    %1339 = sfence
    %1340 = vsyncpa [#allocation3], 1
    %1341 = vsyncpa [#allocation4], 1
    %1342 = vsyncpa [#allocation5], 1

</llo_original>
